<compile_context>
chip_gen: v7x
topology: tpu7x:2x2x1
jax: 0.10.0
libtpu: 0.0.40
codegen_flags: <defaults>
</compile_context>

<pallas_src>
import jax
import jax.numpy as jnp
from jax.experimental import pallas as pl
from jax.experimental.pallas import tpu as pltpu

EPS = 1e-3
_COUT_CHUNK = 256  # Cout tile for the in-kernel matmul/BN epilogue loop


def _fused_kernel(a_ref, b_ref, w_ref, gamma_ref, beta_ref, o_ref):
    # a_ref, b_ref : [Cin, P]    f32   (free reshape of NCHW, N == 1)
    # w_ref        : [Cin, Cout] bf16  (pre-transposed once at init)
    # gamma, beta  : [1, Cout]   f32
    # o_ref        : [P, Cout]   bf16 (or f32 if requested)
    p = o_ref.shape[0]
    cout = o_ref.shape[1]

    # Residual add in f32 (exact), one in-kernel transpose (f32, XLU), then a
    # single cast to bf16 to feed the MXU.
    xt = jnp.transpose(a_ref[...] + b_ref[...], (1, 0)).astype(jnp.bfloat16)  # [P, Cin]

    inv_p = jnp.float32(1.0 / p)  # BN divisor = true pixel count (biased var)
    # Chunked over Cout: 1x1-conv matmul + one-pass BatchNorm per 256 channels.
    for c in range(0, cout, _COUT_CHUNK):
        w_c = w_ref[:, c:c + _COUT_CHUNK]                       # [Cin, chunk] bf16
        y = jnp.dot(xt, w_c, preferred_element_type=jnp.float32)  # [P, chunk] f32
        mean = jnp.sum(y, axis=0, keepdims=True) * inv_p        # [1, chunk]
        ex2 = jnp.sum(y * y, axis=0, keepdims=True) * inv_p     # E[y^2]
        var = jnp.maximum(ex2 - mean * mean, 0.0)               # clamp negatives
        scale = gamma_ref[:, c:c + _COUT_CHUNK] * jax.lax.rsqrt(var + EPS)
        shift = beta_ref[:, c:c + _COUT_CHUNK] - mean * scale
        o_ref[:, c:c + _COUT_CHUNK] = (y * scale + shift).astype(o_ref.dtype)
    # TODO(synk): training-mode BN also updates running_mean/running_var
    # buffers; those side-effect updates are not emitted (forward output does
    # not depend on them).


def fused_add_conv1x1_bn(x538, x523, w_cin_cout_bf16, gamma, beta,
                         *, out_dtype=jnp.bfloat16):
    """x538/x523: [1, Cin, H, W] f32; w_cin_cout_bf16: [Cin, Cout] bf16 (prepped once).

    Returns NHWC [1, H, W, Cout] in `out_dtype` (free reshape of the kernel's
    lane-dense [P, Cout] output).  Any NCHW re-layout should be fused into the
    consumer that actually needs it.
    """
    N, Cin, H, W = x538.shape
    assert N == 1, "free NCHW -> [Cin, P] reshape only holds for N == 1"
    Cout = w_cin_cout_bf16.shape[1]
    assert Cout % _COUT_CHUNK == 0
    P = N * H * W

    # Pure reshapes (no data movement) — no wrapper-side transposes.
    a = x538.reshape(Cin, P)
    b = x523.reshape(Cin, P)
    g = gamma.reshape(1, Cout).astype(jnp.float32)
    bt = beta.reshape(1, Cout).astype(jnp.float32)

    vmem = pltpu.MemorySpace.VMEM
    out = pl.pallas_call(
        _fused_kernel,
        out_shape=jax.ShapeDtypeStruct((P, Cout), out_dtype),
        in_specs=[pl.BlockSpec(memory_space=vmem)] * 5,
        out_specs=pl.BlockSpec(memory_space=vmem),
    )(a, b, w_cin_cout_bf16, g, bt)

    return out.reshape(N, H, W, Cout)


if __name__ == "__main__":
    key = jax.random.PRNGKey(0)
    k1, k2, k3 = jax.random.split(key, 3)

    N, Cin, H, W, Cout = 1, 256, 7, 7, 1280

    x538 = jax.random.normal(k1, (N, Cin, H, W), dtype=jnp.float32)
    x523 = jax.random.normal(k2, (N, Cin, H, W), dtype=jnp.float32)

    # Conv2d weight (deterministic init); BatchNorm affine defaults: gamma=1, beta=0.
    weight = jax.random.normal(k3, (Cout, Cin, 1, 1), dtype=jnp.float32) * 0.05
    gamma = jnp.ones((Cout,), dtype=jnp.float32)
    beta = jnp.zeros((Cout,), dtype=jnp.float32)

    # One-time init prep (NOT in the per-call hot path): [Cout,Cin,1,1] ->
    # [Cin,Cout], stored in bf16 for the MXU / halved weight DMA.
    w_prepped = jnp.transpose(weight.reshape(Cout, Cin), (1, 0)).astype(jnp.bfloat16)
    w_prepped = jax.block_until_ready(w_prepped)

    out_nhwc = fused_add_conv1x1_bn(x538, x523, w_prepped, gamma, beta)
    out_nhwc = jax.block_until_ready(out_nhwc)
    assert out_nhwc.shape == (N, H, W, Cout)
    assert out_nhwc.dtype == jnp.bfloat16

    P = N * H * W
    out = out_nhwc.reshape(P, Cout).astype(jnp.float32)   # [P, Cout] for checking

    # Reference 1: identical math in plain JAX (bf16 matmul operands, f32 stats);
    # only diff vs kernel is bf16 output rounding + chunked accumulation order.
    a_bf = jnp.transpose(x538 + x523, (0, 2, 3, 1)).reshape(P, Cin).astype(jnp.bfloat16)
    y = jnp.dot(a_bf, w_prepped, preferred_element_type=jnp.float32)
    mean = jnp.mean(y, axis=0, keepdims=True)
    var = jnp.mean((y - mean) ** 2, axis=0, keepdims=True)
    ref = (y - mean) / jnp.sqrt(var + EPS)
    assert jnp.allclose(out, ref, atol=3e-2, rtol=3e-2), "mismatch vs bf16 reference"

    # Reference 2: full-f32 PyTorch-module semantics (looser tol: bf16 operand
    # rounding + bf16 output store).
    a32 = jnp.transpose(x538 + x523, (0, 2, 3, 1)).reshape(P, Cin)
    y32 = a32 @ jnp.transpose(weight.reshape(Cout, Cin), (1, 0))
    m32 = jnp.mean(y32, axis=0, keepdims=True)
    v32 = jnp.mean((y32 - m32) ** 2, axis=0, keepdims=True)
    ref32 = (y32 - m32) / jnp.sqrt(v32 + EPS)
    assert jnp.allclose(out, ref32, atol=6e-2, rtol=6e-2), "mismatch vs f32 reference"

    print("KERNEL_OK")
</pallas_src>

<mosaic_0001>
module attributes {stable_mosaic.version = 11 : i64} {
  func.func @_fused_kernel(%arg0: memref<256x49xf32, #tpu.memory_space<vmem>>, %arg1: memref<256x49xf32, #tpu.memory_space<vmem>>, %arg2: memref<256x1280xbf16, #tpu.memory_space<vmem>>, %arg3: memref<1x1280xf32, #tpu.memory_space<vmem>>, %arg4: memref<1x1280xf32, #tpu.memory_space<vmem>>, %arg5: memref<49x1280xbf16, #tpu.memory_space<vmem>>) attributes {dimension_semantics = [], scalar_prefetch = 0 : i64, scratch_operands = 0 : i64, tpu.core_type = #tpu.core_type<tc>} {
    %c0 = arith.constant 0 : index
    %c0_0 = arith.constant 0 : index
    %0 = vector.load %arg0[%c0, %c0_0] : memref<256x49xf32, #tpu.memory_space<vmem>>, vector<256x49xf32>
    %c0_1 = arith.constant 0 : index
    %c0_2 = arith.constant 0 : index
    %1 = vector.load %arg1[%c0_1, %c0_2] : memref<256x49xf32, #tpu.memory_space<vmem>>, vector<256x49xf32>
    %2 = arith.addf %0, %1 : vector<256x49xf32>
    %3 = tpu.transpose %2, [1, 0] : vector<256x49xf32> -> vector<49x256xf32>
    %4 = arith.truncf %3 : vector<49x256xf32> to vector<49x256xbf16>
    %c0_3 = arith.constant 0 : index
    %c0_4 = arith.constant 0 : index
    %5 = vector.load %arg2[%c0_3, %c0_4] : memref<256x1280xbf16, #tpu.memory_space<vmem>>, vector<256x256xbf16>
    %cst = arith.constant dense<0.000000e+00> : vector<49x256xf32>
    %6 = tpu.matmul %4, %5, %cst {dimension_numbers = #tpu.dot_dimension_numbers<[1], [0], [0], [1], [0, 0, 1, 1], [], []>} : vector<49x256xbf16>, vector<256x256xbf16>, vector<49x256xf32> -> vector<49x256xf32>
    %cst_5 = arith.constant dense<0.000000e+00> : vector<256xf32>
    %7 = vector.multi_reduction <add>, %6, %cst_5 [0] : vector<49x256xf32> to vector<256xf32>
    %8 = vector.shape_cast %7 : vector<256xf32> to vector<1x256xf32>
    %cst_6 = arith.constant 0.0204081628 : f32
    %9 = vector.broadcast %cst_6 : f32 to vector<1x256xf32>
    %10 = arith.mulf %8, %9 : vector<1x256xf32>
    %11 = arith.mulf %6, %6 : vector<49x256xf32>
    %cst_7 = arith.constant dense<0.000000e+00> : vector<256xf32>
    %12 = vector.multi_reduction <add>, %11, %cst_7 [0] : vector<49x256xf32> to vector<256xf32>
    %13 = vector.shape_cast %12 : vector<256xf32> to vector<1x256xf32>
    %cst_8 = arith.constant 0.0204081628 : f32
    %14 = vector.broadcast %cst_8 : f32 to vector<1x256xf32>
    %15 = arith.mulf %13, %14 : vector<1x256xf32>
    %16 = arith.mulf %10, %10 : vector<1x256xf32>
    %17 = arith.subf %15, %16 : vector<1x256xf32>
    %cst_9 = arith.constant 0.000000e+00 : f32
    %18 = vector.broadcast %cst_9 : f32 to vector<1x256xf32>
    %19 = arith.maximumf %17, %18 : vector<1x256xf32>
    %c0_10 = arith.constant 0 : index
    %c0_11 = arith.constant 0 : index
    %20 = vector.load %arg3[%c0_10, %c0_11] : memref<1x1280xf32, #tpu.memory_space<vmem>>, vector<1x256xf32>
    %cst_12 = arith.constant 1.000000e-03 : f32
    %21 = vector.broadcast %cst_12 : f32 to vector<1x256xf32>
    %22 = arith.addf %19, %21 : vector<1x256xf32>
    %23 = math.rsqrt %22 : vector<1x256xf32>
    %24 = arith.mulf %20, %23 : vector<1x256xf32>
    %c0_13 = arith.constant 0 : index
    %c0_14 = arith.constant 0 : index
    %25 = vector.load %arg4[%c0_13, %c0_14] : memref<1x1280xf32, #tpu.memory_space<vmem>>, vector<1x256xf32>
    %26 = arith.mulf %10, %24 : vector<1x256xf32>
    %27 = arith.subf %25, %26 : vector<1x256xf32>
    %28 = vector.broadcast %24 : vector<1x256xf32> to vector<49x256xf32>
    %29 = arith.mulf %6, %28 : vector<49x256xf32>
    %30 = vector.broadcast %27 : vector<1x256xf32> to vector<49x256xf32>
    %31 = arith.addf %29, %30 : vector<49x256xf32>
    %32 = arith.truncf %31 : vector<49x256xf32> to vector<49x256xbf16>
    %c0_15 = arith.constant 0 : index
    %c0_16 = arith.constant 0 : index
    %33 = vector.load %arg5[%c0_15, %c0_16] : memref<49x1280xbf16, #tpu.memory_space<vmem>>, vector<49x256xbf16>
    tpu.vector_store %arg5[%c0_15, %c0_16], %32 {strides = array<i32>} : memref<49x1280xbf16, #tpu.memory_space<vmem>>, vector<49x256xbf16>,
    %c0_17 = arith.constant 0 : index
    %c256 = arith.constant 256 : index
    %34 = vector.load %arg2[%c0_17, %c256] : memref<256x1280xbf16, #tpu.memory_space<vmem>>, vector<256x256xbf16>
    %cst_18 = arith.constant dense<0.000000e+00> : vector<49x256xf32>
    %35 = tpu.matmul %4, %34, %cst_18 {dimension_numbers = #tpu.dot_dimension_numbers<[1], [0], [0], [1], [0, 0, 1, 1], [], []>} : vector<49x256xbf16>, vector<256x256xbf16>, vector<49x256xf32> -> vector<49x256xf32>
    %cst_19 = arith.constant dense<0.000000e+00> : vector<256xf32>
    %36 = vector.multi_reduction <add>, %35, %cst_19 [0] : vector<49x256xf32> to vector<256xf32>
    %37 = vector.shape_cast %36 : vector<256xf32> to vector<1x256xf32>
    %cst_20 = arith.constant 0.0204081628 : f32
    %38 = vector.broadcast %cst_20 : f32 to vector<1x256xf32>
    %39 = arith.mulf %37, %38 : vector<1x256xf32>
    %40 = arith.mulf %35, %35 : vector<49x256xf32>
    %cst_21 = arith.constant dense<0.000000e+00> : vector<256xf32>
    %41 = vector.multi_reduction <add>, %40, %cst_21 [0] : vector<49x256xf32> to vector<256xf32>
    %42 = vector.shape_cast %41 : vector<256xf32> to vector<1x256xf32>
    %cst_22 = arith.constant 0.0204081628 : f32
    %43 = vector.broadcast %cst_22 : f32 to vector<1x256xf32>
    %44 = arith.mulf %42, %43 : vector<1x256xf32>
    %45 = arith.mulf %39, %39 : vector<1x256xf32>
    %46 = arith.subf %44, %45 : vector<1x256xf32>
    %cst_23 = arith.constant 0.000000e+00 : f32
    %47 = vector.broadcast %cst_23 : f32 to vector<1x256xf32>
    %48 = arith.maximumf %46, %47 : vector<1x256xf32>
    %c0_24 = arith.constant 0 : index
    %c256_25 = arith.constant 256 : index
    %49 = vector.load %arg3[%c0_24, %c256_25] : memref<1x1280xf32, #tpu.memory_space<vmem>>, vector<1x256xf32>
    %cst_26 = arith.constant 1.000000e-03 : f32
    %50 = vector.broadcast %cst_26 : f32 to vector<1x256xf32>
    %51 = arith.addf %48, %50 : vector<1x256xf32>
    %52 = math.rsqrt %51 : vector<1x256xf32>
    %53 = arith.mulf %49, %52 : vector<1x256xf32>
    %c0_27 = arith.constant 0 : index
    %c256_28 = arith.constant 256 : index
    %54 = vector.load %arg4[%c0_27, %c256_28] : memref<1x1280xf32, #tpu.memory_space<vmem>>, vector<1x256xf32>
    %55 = arith.mulf %39, %53 : vector<1x256xf32>
    %56 = arith.subf %54, %55 : vector<1x256xf32>
    %57 = vector.broadcast %53 : vector<1x256xf32> to vector<49x256xf32>
    %58 = arith.mulf %35, %57 : vector<49x256xf32>
    %59 = vector.broadcast %56 : vector<1x256xf32> to vector<49x256xf32>
    %60 = arith.addf %58, %59 : vector<49x256xf32>
    %61 = arith.truncf %60 : vector<49x256xf32> to vector<49x256xbf16>
    %c0_29 = arith.constant 0 : index
    %c256_30 = arith.constant 256 : index
    %62 = vector.load %arg5[%c0_29, %c256_30] : memref<49x1280xbf16, #tpu.memory_space<vmem>>, vector<49x256xbf16>
    tpu.vector_store %arg5[%c0_29, %c256_30], %61 {strides = array<i32>} : memref<49x1280xbf16, #tpu.memory_space<vmem>>, vector<49x256xbf16>,
    %c0_31 = arith.constant 0 : index
    %c512 = arith.constant 512 : index
    %63 = vector.load %arg2[%c0_31, %c512] : memref<256x1280xbf16, #tpu.memory_space<vmem>>, vector<256x256xbf16>
    %cst_32 = arith.constant dense<0.000000e+00> : vector<49x256xf32>
    %64 = tpu.matmul %4, %63, %cst_32 {dimension_numbers = #tpu.dot_dimension_numbers<[1], [0], [0], [1], [0, 0, 1, 1], [], []>} : vector<49x256xbf16>, vector<256x256xbf16>, vector<49x256xf32> -> vector<49x256xf32>
    %cst_33 = arith.constant dense<0.000000e+00> : vector<256xf32>
    %65 = vector.multi_reduction <add>, %64, %cst_33 [0] : vector<49x256xf32> to vector<256xf32>
    %66 = vector.shape_cast %65 : vector<256xf32> to vector<1x256xf32>
    %cst_34 = arith.constant 0.0204081628 : f32
    %67 = vector.broadcast %cst_34 : f32 to vector<1x256xf32>
    %68 = arith.mulf %66, %67 : vector<1x256xf32>
    %69 = arith.mulf %64, %64 : vector<49x256xf32>
    %cst_35 = arith.constant dense<0.000000e+00> : vector<256xf32>
    %70 = vector.multi_reduction <add>, %69, %cst_35 [0] : vector<49x256xf32> to vector<256xf32>
    %71 = vector.shape_cast %70 : vector<256xf32> to vector<1x256xf32>
    %cst_36 = arith.constant 0.0204081628 : f32
    %72 = vector.broadcast %cst_36 : f32 to vector<1x256xf32>
    %73 = arith.mulf %71, %72 : vector<1x256xf32>
    %74 = arith.mulf %68, %68 : vector<1x256xf32>
    %75 = arith.subf %73, %74 : vector<1x256xf32>
    %cst_37 = arith.constant 0.000000e+00 : f32
    %76 = vector.broadcast %cst_37 : f32 to vector<1x256xf32>
    %77 = arith.maximumf %75, %76 : vector<1x256xf32>
    %c0_38 = arith.constant 0 : index
    %c512_39 = arith.constant 512 : index
    %78 = vector.load %arg3[%c0_38, %c512_39] : memref<1x1280xf32, #tpu.memory_space<vmem>>, vector<1x256xf32>
    %cst_40 = arith.constant 1.000000e-03 : f32
    %79 = vector.broadcast %cst_40 : f32 to vector<1x256xf32>
    %80 = arith.addf %77, %79 : vector<1x256xf32>
    %81 = math.rsqrt %80 : vector<1x256xf32>
    %82 = arith.mulf %78, %81 : vector<1x256xf32>
    %c0_41 = arith.constant 0 : index
    %c512_42 = arith.constant 512 : index
    %83 = vector.load %arg4[%c0_41, %c512_42] : memref<1x1280xf32, #tpu.memory_space<vmem>>, vector<1x256xf32>
    %84 = arith.mulf %68, %82 : vector<1x256xf32>
    %85 = arith.subf %83, %84 : vector<1x256xf32>
    %86 = vector.broadcast %82 : vector<1x256xf32> to vector<49x256xf32>
    %87 = arith.mulf %64, %86 : vector<49x256xf32>
    %88 = vector.broadcast %85 : vector<1x256xf32> to vector<49x256xf32>
    %89 = arith.addf %87, %88 : vector<49x256xf32>
    %90 = arith.truncf %89 : vector<49x256xf32> to vector<49x256xbf16>
    %c0_43 = arith.constant 0 : index
    %c512_44 = arith.constant 512 : index
    %91 = vector.load %arg5[%c0_43, %c512_44] : memref<49x1280xbf16, #tpu.memory_space<vmem>>, vector<49x256xbf16>
    tpu.vector_store %arg5[%c0_43, %c512_44], %90 {strides = array<i32>} : memref<49x1280xbf16, #tpu.memory_space<vmem>>, vector<49x256xbf16>,
    %c0_45 = arith.constant 0 : index
    %c768 = arith.constant 768 : index
    %92 = vector.load %arg2[%c0_45, %c768] : memref<256x1280xbf16, #tpu.memory_space<vmem>>, vector<256x256xbf16>
    %cst_46 = arith.constant dense<0.000000e+00> : vector<49x256xf32>
    %93 = tpu.matmul %4, %92, %cst_46 {dimension_numbers = #tpu.dot_dimension_numbers<[1], [0], [0], [1], [0, 0, 1, 1], [], []>} : vector<49x256xbf16>, vector<256x256xbf16>, vector<49x256xf32> -> vector<49x256xf32>
    %cst_47 = arith.constant dense<0.000000e+00> : vector<256xf32>
    %94 = vector.multi_reduction <add>, %93, %cst_47 [0] : vector<49x256xf32> to vector<256xf32>
    %95 = vector.shape_cast %94 : vector<256xf32> to vector<1x256xf32>
    %cst_48 = arith.constant 0.0204081628 : f32
    %96 = vector.broadcast %cst_48 : f32 to vector<1x256xf32>
    %97 = arith.mulf %95, %96 : vector<1x256xf32>
    %98 = arith.mulf %93, %93 : vector<49x256xf32>
    %cst_49 = arith.constant dense<0.000000e+00> : vector<256xf32>
    %99 = vector.multi_reduction <add>, %98, %cst_49 [0] : vector<49x256xf32> to vector<256xf32>
    %100 = vector.shape_cast %99 : vector<256xf32> to vector<1x256xf32>
    %cst_50 = arith.constant 0.0204081628 : f32
    %101 = vector.broadcast %cst_50 : f32 to vector<1x256xf32>
    %102 = arith.mulf %100, %101 : vector<1x256xf32>
    %103 = arith.mulf %97, %97 : vector<1x256xf32>
    %104 = arith.subf %102, %103 : vector<1x256xf32>
    %cst_51 = arith.constant 0.000000e+00 : f32
    %105 = vector.broadcast %cst_51 : f32 to vector<1x256xf32>
    %106 = arith.maximumf %104, %105 : vector<1x256xf32>
    %c0_52 = arith.constant 0 : index
    %c768_53 = arith.constant 768 : index
    %107 = vector.load %arg3[%c0_52, %c768_53] : memref<1x1280xf32, #tpu.memory_space<vmem>>, vector<1x256xf32>
    %cst_54 = arith.constant 1.000000e-03 : f32
    %108 = vector.broadcast %cst_54 : f32 to vector<1x256xf32>
    %109 = arith.addf %106, %108 : vector<1x256xf32>
    %110 = math.rsqrt %109 : vector<1x256xf32>
    %111 = arith.mulf %107, %110 : vector<1x256xf32>
    %c0_55 = arith.constant 0 : index
    %c768_56 = arith.constant 768 : index
    %112 = vector.load %arg4[%c0_55, %c768_56] : memref<1x1280xf32, #tpu.memory_space<vmem>>, vector<1x256xf32>
    %113 = arith.mulf %97, %111 : vector<1x256xf32>
    %114 = arith.subf %112, %113 : vector<1x256xf32>
    %115 = vector.broadcast %111 : vector<1x256xf32> to vector<49x256xf32>
    %116 = arith.mulf %93, %115 : vector<49x256xf32>
    %117 = vector.broadcast %114 : vector<1x256xf32> to vector<49x256xf32>
    %118 = arith.addf %116, %117 : vector<49x256xf32>
    %119 = arith.truncf %118 : vector<49x256xf32> to vector<49x256xbf16>
    %c0_57 = arith.constant 0 : index
    %c768_58 = arith.constant 768 : index
    %120 = vector.load %arg5[%c0_57, %c768_58] : memref<49x1280xbf16, #tpu.memory_space<vmem>>, vector<49x256xbf16>
    tpu.vector_store %arg5[%c0_57, %c768_58], %119 {strides = array<i32>} : memref<49x1280xbf16, #tpu.memory_space<vmem>>, vector<49x256xbf16>,
    %c0_59 = arith.constant 0 : index
    %c1024 = arith.constant 1024 : index
    %121 = vector.load %arg2[%c0_59, %c1024] : memref<256x1280xbf16, #tpu.memory_space<vmem>>, vector<256x256xbf16>
    %cst_60 = arith.constant dense<0.000000e+00> : vector<49x256xf32>
    %122 = tpu.matmul %4, %121, %cst_60 {dimension_numbers = #tpu.dot_dimension_numbers<[1], [0], [0], [1], [0, 0, 1, 1], [], []>} : vector<49x256xbf16>, vector<256x256xbf16>, vector<49x256xf32> -> vector<49x256xf32>
    %cst_61 = arith.constant dense<0.000000e+00> : vector<256xf32>
    %123 = vector.multi_reduction <add>, %122, %cst_61 [0] : vector<49x256xf32> to vector<256xf32>
    %124 = vector.shape_cast %123 : vector<256xf32> to vector<1x256xf32>
    %cst_62 = arith.constant 0.0204081628 : f32
    %125 = vector.broadcast %cst_62 : f32 to vector<1x256xf32>
    %126 = arith.mulf %124, %125 : vector<1x256xf32>
    %127 = arith.mulf %122, %122 : vector<49x256xf32>
    %cst_63 = arith.constant dense<0.000000e+00> : vector<256xf32>
    %128 = vector.multi_reduction <add>, %127, %cst_63 [0] : vector<49x256xf32> to vector<256xf32>
    %129 = vector.shape_cast %128 : vector<256xf32> to vector<1x256xf32>
    %cst_64 = arith.constant 0.0204081628 : f32
    %130 = vector.broadcast %cst_64 : f32 to vector<1x256xf32>
    %131 = arith.mulf %129, %130 : vector<1x256xf32>
    %132 = arith.mulf %126, %126 : vector<1x256xf32>
    %133 = arith.subf %131, %132 : vector<1x256xf32>
    %cst_65 = arith.constant 0.000000e+00 : f32
    %134 = vector.broadcast %cst_65 : f32 to vector<1x256xf32>
    %135 = arith.maximumf %133, %134 : vector<1x256xf32>
    %c0_66 = arith.constant 0 : index
    %c1024_67 = arith.constant 1024 : index
    %136 = vector.load %arg3[%c0_66, %c1024_67] : memref<1x1280xf32, #tpu.memory_space<vmem>>, vector<1x256xf32>
    %cst_68 = arith.constant 1.000000e-03 : f32
    %137 = vector.broadcast %cst_68 : f32 to vector<1x256xf32>
    %138 = arith.addf %135, %137 : vector<1x256xf32>
    %139 = math.rsqrt %138 : vector<1x256xf32>
    %140 = arith.mulf %136, %139 : vector<1x256xf32>
    %c0_69 = arith.constant 0 : index
    %c1024_70 = arith.constant 1024 : index
    %141 = vector.load %arg4[%c0_69, %c1024_70] : memref<1x1280xf32, #tpu.memory_space<vmem>>, vector<1x256xf32>
    %142 = arith.mulf %126, %140 : vector<1x256xf32>
    %143 = arith.subf %141, %142 : vector<1x256xf32>
    %144 = vector.broadcast %140 : vector<1x256xf32> to vector<49x256xf32>
    %145 = arith.mulf %122, %144 : vector<49x256xf32>
    %146 = vector.broadcast %143 : vector<1x256xf32> to vector<49x256xf32>
    %147 = arith.addf %145, %146 : vector<49x256xf32>
    %148 = arith.truncf %147 : vector<49x256xf32> to vector<49x256xbf16>
    %c0_71 = arith.constant 0 : index
    %c1024_72 = arith.constant 1024 : index
    %149 = vector.load %arg5[%c0_71, %c1024_72] : memref<49x1280xbf16, #tpu.memory_space<vmem>>, vector<49x256xbf16>
    tpu.vector_store %arg5[%c0_71, %c1024_72], %148 {strides = array<i32>} : memref<49x1280xbf16, #tpu.memory_space<vmem>>, vector<49x256xbf16>,
    return
  }
}

</mosaic_0001>

<llo_original>
// kernel: tpu_custom_call.1
$region0: #{tpu_custom_call.1}
  #allocation0 [shape = 'u32[]', space=smem, size = 0x4, offset = 0x4, fixed_abs, tag = 'smem constant byte address 0x4 - core index']
  #allocation1 [shape = 'u32[144,128]{1,0:T(1,128)}', space=vmem, size = 0x12000, scoped, tag = 'internal scratch']
  %s0 = inlined_call_operand.vmem [shape: f32[256,49], index: 0, kind: input, shape index: {}]
  %s1 = inlined_call_operand.vmem [shape: f32[256,49], index: 1, kind: input, shape index: {}]
  %s2 = inlined_call_operand.hbm [shape: bf16[256,1280], index: 2, kind: input, shape index: {}]
  %s3 = inlined_call_operand.vmem [shape: f32[1,1280], index: 3, kind: input, shape index: {}]
  %s4 = inlined_call_operand.vmem [shape: f32[1,1280], index: 4, kind: input, shape index: {}]
  %s5 = inlined_call_operand.hbm [shape: bf16[49,1280], index: 5, kind: output, shape index: {}]
  %s6 = sld [smem:[#allocation0]]
  $region34: #{tpu_custom_call.1} parent=0
    _
  %s8 = ssub.s32 1, %s6
  %s9 = scalar_select 0, %s8, %s6
  $region1: #{tpu_custom_call.1} parent=0
    #allocation2 [shape = 'u8[655360]{0}', space=vmem, size = 0xa0000, scoped, tag = 'input window, operand 2, single buffered']
    #allocation3 [shape = 's32[1]{0}', space=sflag, size = 0x4, scoped, tag = 'scoped memory for tpu_custom_call.1']
    #allocation4 [shape = 's32[1]{0}', space=sflag, size = 0x4, scoped, tag = 'scoped memory for tpu_custom_call.1']
    #allocation5 [shape = 'u8[143360]{0}', space=vmem, size = 0x23000, scoped, tag = 'output window, operand 0, single buffered']
    %10 = vsyncpa [#allocation3], 0
    %11 = vsyncpa [#allocation4], 0
    // Predicated region
    $region2: #{tpu_custom_call.1} parent=1 // pred_check
      _
    $region3: #{tpu_custom_call.1} parent=1 // pred_check_branch
      %13 = sbr.rel (0) target = $region5
    $region4: #{tpu_custom_call.1} parent=1 // pred_region
      _
    $region5: #{tpu_custom_call.1} parent=1 // pred_fallthru
      _
    // Predicated region
    $region6: #{tpu_custom_call.1} parent=1 // pred_check
      _
    $region7: #{tpu_custom_call.1} parent=1 // pred_check_branch
      %15 = sbr.rel (0) target = $region9
    $region8: #{tpu_custom_call.1} parent=1 // pred_region
      _
    $region9: #{tpu_custom_call.1} parent=1 // pred_fallthru
      _
    // Predicated region
    $region10: #{tpu_custom_call.1} parent=1 // pred_check
      _
    $region11: #{tpu_custom_call.1} parent=1 // pred_check_branch
      %17 = sbr.rel (0) target = $region13
    $region12: #{tpu_custom_call.1} parent=1 // pred_region
      %s19 = ssub.s32 20480, 20480
      %20 = vsyncadd [#allocation3], %s19
      %s21 = sshll.u32 [#allocation2], 4
      %s22 = int_to_ptr.vmem [resolvable:$true] %s21
      %27 = dma.hbm_to_vmem [thread:$0]  %s2, 20480, %s22, [#allocation3], 640, 640, 40
    $region13: #{tpu_custom_call.1} parent=1 // pred_fallthru
      _
    // Predicated region
    $region14: #{tpu_custom_call.1} parent=1 // pred_check
      _
    $region15: #{tpu_custom_call.1} parent=1 // pred_check_branch
      %29 = sbr.rel (0) target = $region17
    $region16: #{tpu_custom_call.1} parent=1 // pred_region
      _
    $region17: #{tpu_custom_call.1} parent=1 // pred_fallthru
      _
    // Predicated region
    $region18: #{tpu_custom_call.1} parent=1 // pred_check
      _
    $region19: #{tpu_custom_call.1} parent=1 // pred_check_branch
      %31 = sbr.rel (0) target = $region21
    $region20: #{tpu_custom_call.1} parent=1 // pred_region
      _
    $region21: #{tpu_custom_call.1} parent=1 // pred_fallthru
      _
    // Predicated region
    $region22: #{tpu_custom_call.1} parent=1 // pred_check
      _
    $region23: #{tpu_custom_call.1} parent=1 // pred_check_branch
      %33 = sbr.rel (0) target = $region25
    $region24: #{tpu_custom_call.1} parent=1 // pred_region
      %34 = dma.done [#allocation3], 20480
    $region25: #{tpu_custom_call.1} parent=1 // pred_fallthru
      _
    %v35 = vld [vmem:[%s0] sm:$0xff]
    %v36 = vld [vmem:[%s0 + $0x8] sm:$0xff]
    %v37 = vld [vmem:[%s0 + $0x10] sm:$0xff]
    %v38 = vld [vmem:[%s0 + $0x18] sm:$0xff]
    %v39 = vld [vmem:[%s0 + $0x20] sm:$0xff]
    %v40 = vld [vmem:[%s0 + $0x28] sm:$0xff]
    %v41 = vld [vmem:[%s0 + $0x30] sm:$0xff]
    %v42 = vld [vmem:[%s0 + $0x38] sm:$0xff]
    %v43 = vld [vmem:[%s0 + $0x40] sm:$0xff]
    %v44 = vld [vmem:[%s0 + $0x48] sm:$0xff]
    %v45 = vld [vmem:[%s0 + $0x50] sm:$0xff]
    %v46 = vld [vmem:[%s0 + $0x58] sm:$0xff]
    %v47 = vld [vmem:[%s0 + $0x60] sm:$0xff]
    %v48 = vld [vmem:[%s0 + $0x68] sm:$0xff]
    %v49 = vld [vmem:[%s0 + $0x70] sm:$0xff]
    %v50 = vld [vmem:[%s0 + $0x78] sm:$0xff]
    %v51 = vld [vmem:[%s0 + $0x80] sm:$0xff]
    %v52 = vld [vmem:[%s0 + $0x88] sm:$0xff]
    %v53 = vld [vmem:[%s0 + $0x90] sm:$0xff]
    %v54 = vld [vmem:[%s0 + $0x98] sm:$0xff]
    %v55 = vld [vmem:[%s0 + $0xa0] sm:$0xff]
    %v56 = vld [vmem:[%s0 + $0xa8] sm:$0xff]
    %v57 = vld [vmem:[%s0 + $0xb0] sm:$0xff]
    %v58 = vld [vmem:[%s0 + $0xb8] sm:$0xff]
    %v59 = vld [vmem:[%s0 + $0xc0] sm:$0xff]
    %v60 = vld [vmem:[%s0 + $0xc8] sm:$0xff]
    %v61 = vld [vmem:[%s0 + $0xd0] sm:$0xff]
    %v62 = vld [vmem:[%s0 + $0xd8] sm:$0xff]
    %v63 = vld [vmem:[%s0 + $0xe0] sm:$0xff]
    %v64 = vld [vmem:[%s0 + $0xe8] sm:$0xff]
    %v65 = vld [vmem:[%s0 + $0xf0] sm:$0xff]
    %v66 = vld [vmem:[%s0 + $0xf8] sm:$0xff]
    %v67 = vld [vmem:[%s1] sm:$0xff]
    %v68 = vld [vmem:[%s1 + $0x8] sm:$0xff]
    %v69 = vld [vmem:[%s1 + $0x10] sm:$0xff]
    %v70 = vld [vmem:[%s1 + $0x18] sm:$0xff]
    %v71 = vld [vmem:[%s1 + $0x20] sm:$0xff]
    %v72 = vld [vmem:[%s1 + $0x28] sm:$0xff]
    %v73 = vld [vmem:[%s1 + $0x30] sm:$0xff]
    %v74 = vld [vmem:[%s1 + $0x38] sm:$0xff]
    %v75 = vld [vmem:[%s1 + $0x40] sm:$0xff]
    %v76 = vld [vmem:[%s1 + $0x48] sm:$0xff]
    %v77 = vld [vmem:[%s1 + $0x50] sm:$0xff]
    %v78 = vld [vmem:[%s1 + $0x58] sm:$0xff]
    %v79 = vld [vmem:[%s1 + $0x60] sm:$0xff]
    %v80 = vld [vmem:[%s1 + $0x68] sm:$0xff]
    %v81 = vld [vmem:[%s1 + $0x70] sm:$0xff]
    %v82 = vld [vmem:[%s1 + $0x78] sm:$0xff]
    %v83 = vld [vmem:[%s1 + $0x80] sm:$0xff]
    %v84 = vld [vmem:[%s1 + $0x88] sm:$0xff]
    %v85 = vld [vmem:[%s1 + $0x90] sm:$0xff]
    %v86 = vld [vmem:[%s1 + $0x98] sm:$0xff]
    %v87 = vld [vmem:[%s1 + $0xa0] sm:$0xff]
    %v88 = vld [vmem:[%s1 + $0xa8] sm:$0xff]
    %v89 = vld [vmem:[%s1 + $0xb0] sm:$0xff]
    %v90 = vld [vmem:[%s1 + $0xb8] sm:$0xff]
    %v91 = vld [vmem:[%s1 + $0xc0] sm:$0xff]
    %v92 = vld [vmem:[%s1 + $0xc8] sm:$0xff]
    %v93 = vld [vmem:[%s1 + $0xd0] sm:$0xff]
    %v94 = vld [vmem:[%s1 + $0xd8] sm:$0xff]
    %v95 = vld [vmem:[%s1 + $0xe0] sm:$0xff]
    %v96 = vld [vmem:[%s1 + $0xe8] sm:$0xff]
    %v97 = vld [vmem:[%s1 + $0xf0] sm:$0xff]
    %v98 = vld [vmem:[%s1 + $0xf8] sm:$0xff]
    %v99 = vadd.f32 %v35, %v67
    %v100 = vadd.f32 %v36, %v68
    %v101 = vadd.f32 %v37, %v69
    %v102 = vadd.f32 %v38, %v70
    %v103 = vadd.f32 %v39, %v71
    %v104 = vadd.f32 %v40, %v72
    %v105 = vadd.f32 %v41, %v73
    %v106 = vadd.f32 %v42, %v74
    %v107 = vadd.f32 %v43, %v75
    %v108 = vadd.f32 %v44, %v76
    %v109 = vadd.f32 %v45, %v77
    %v110 = vadd.f32 %v46, %v78
    %v111 = vadd.f32 %v47, %v79
    %v112 = vadd.f32 %v48, %v80
    %v113 = vadd.f32 %v49, %v81
    %v114 = vadd.f32 %v50, %v82
    %v115 = vadd.f32 %v51, %v83
    %v116 = vadd.f32 %v52, %v84
    %v117 = vadd.f32 %v53, %v85
    %v118 = vadd.f32 %v54, %v86
    %v119 = vadd.f32 %v55, %v87
    %v120 = vadd.f32 %v56, %v88
    %v121 = vadd.f32 %v57, %v89
    %v122 = vadd.f32 %v58, %v90
    %v123 = vadd.f32 %v59, %v91
    %v124 = vadd.f32 %v60, %v92
    %v125 = vadd.f32 %v61, %v93
    %v126 = vadd.f32 %v62, %v94
    %v127 = vadd.f32 %v63, %v95
    %v128 = vadd.f32 %v64, %v96
    %v129 = vadd.f32 %v65, %v97
    %v130 = vadd.f32 %v66, %v98
    %131 = vxpose.xlu0.b32.start [1/16] %v99, 128
    %132 = vxpose.xlu0.b32.cont [2/16] %v100, 128
    %133 = vxpose.xlu0.b32.cont [3/16] %v101, 128
    %134 = vxpose.xlu0.b32.cont [4/16] %v102, 128
    %135 = vxpose.xlu0.b32.cont [5/16] %v103, 128
    %136 = vxpose.xlu0.b32.cont [6/16] %v104, 128
    %137 = vxpose.xlu0.b32.cont [7/16] %v105, 128
    %138 = vxpose.xlu0.b32.cont [8/16] %v106, 128
    %139 = vxpose.xlu0.b32.cont [9/16] %v107, 128
    %140 = vxpose.xlu0.b32.cont [10/16] %v108, 128
    %141 = vxpose.xlu0.b32.cont [11/16] %v109, 128
    %142 = vxpose.xlu0.b32.cont [12/16] %v110, 128
    %143 = vxpose.xlu0.b32.cont [13/16] %v111, 128
    %144 = vxpose.xlu0.b32.cont [14/16] %v112, 128
    %145 = vxpose.xlu0.b32.cont [15/16] %v113, 128
    %146 = vxpose.xlu0.b32.end [16/16] %v114, 128
    %v147 = vpop.trf.xlu0
    %v148 = vpop.trf.xlu0
    %v149 = vpop.trf.xlu0
    %v150 = vpop.trf.xlu0
    %v151 = vpop.trf.xlu0
    %v152 = vpop.trf.xlu0
    %v153 = vpop.trf.xlu0
    %v154 = vpop.trf.xlu0
    %v155 = vpop.trf.xlu0
    %v156 = vpop.trf.xlu0
    %v157 = vpop.trf.xlu0
    %v158 = vpop.trf.xlu0
    %v159 = vpop.trf.xlu0
    %v160 = vpop.trf.xlu0
    %v161 = vpop.trf.xlu0
    %v162 = vpop.trf.xlu0
    %163 = vxpose.xlu0.b32.start [1/16] %v115, 128
    %164 = vxpose.xlu0.b32.cont [2/16] %v116, 128
    %165 = vxpose.xlu0.b32.cont [3/16] %v117, 128
    %166 = vxpose.xlu0.b32.cont [4/16] %v118, 128
    %167 = vxpose.xlu0.b32.cont [5/16] %v119, 128
    %168 = vxpose.xlu0.b32.cont [6/16] %v120, 128
    %169 = vxpose.xlu0.b32.cont [7/16] %v121, 128
    %170 = vxpose.xlu0.b32.cont [8/16] %v122, 128
    %171 = vxpose.xlu0.b32.cont [9/16] %v123, 128
    %172 = vxpose.xlu0.b32.cont [10/16] %v124, 128
    %173 = vxpose.xlu0.b32.cont [11/16] %v125, 128
    %174 = vxpose.xlu0.b32.cont [12/16] %v126, 128
    %175 = vxpose.xlu0.b32.cont [13/16] %v127, 128
    %176 = vxpose.xlu0.b32.cont [14/16] %v128, 128
    %177 = vxpose.xlu0.b32.cont [15/16] %v129, 128
    %178 = vxpose.xlu0.b32.end [16/16] %v130, 128
    %v179 = vpop.trf.xlu0
    %v180 = vpop.trf.xlu0
    %v181 = vpop.trf.xlu0
    %v182 = vpop.trf.xlu0
    %v183 = vpop.trf.xlu0
    %v184 = vpop.trf.xlu0
    %v185 = vpop.trf.xlu0
    %v186 = vpop.trf.xlu0
    %v187 = vpop.trf.xlu0
    %v188 = vpop.trf.xlu0
    %v189 = vpop.trf.xlu0
    %v190 = vpop.trf.xlu0
    %v191 = vpop.trf.xlu0
    %v192 = vpop.trf.xlu0
    %v193 = vpop.trf.xlu0
    %v194 = vpop.trf.xlu0
    %v195 = vpack.c.bf16 %v148, %v147
    %v196 = vpack.c.bf16 %v180, %v179
    %v197 = vpack.c.bf16 %v150, %v149
    %v198 = vpack.c.bf16 %v182, %v181
    %v199 = vpack.c.bf16 %v152, %v151
    %v200 = vpack.c.bf16 %v184, %v183
    %v201 = vpack.c.bf16 %v153, %v153
    %v202 = vpack.c.bf16 %v185, %v185
    %v203 = vld [vmem:[#allocation2] sm:$0xff]
    %v204 = vld [vmem:[#allocation2 + $0x28] sm:$0xff]
    %v205 = vld [vmem:[#allocation2 + $0x50] sm:$0xff]
    %v206 = vld [vmem:[#allocation2 + $0x78] sm:$0xff]
    %v207 = vld [vmem:[#allocation2 + $0xa0] sm:$0xff]
    %v208 = vld [vmem:[#allocation2 + $0xc8] sm:$0xff]
    %v209 = vld [vmem:[#allocation2 + $0xf0] sm:$0xff]
    %v210 = vld [vmem:[#allocation2 + $0x118] sm:$0xff]
    %v211 = vld [vmem:[#allocation2 + $0x140] sm:$0xff]
    %v212 = vld [vmem:[#allocation2 + $0x168] sm:$0xff]
    %v213 = vld [vmem:[#allocation2 + $0x190] sm:$0xff]
    %v214 = vld [vmem:[#allocation2 + $0x1b8] sm:$0xff]
    %v215 = vld [vmem:[#allocation2 + $0x1e0] sm:$0xff]
    %v216 = vld [vmem:[#allocation2 + $0x208] sm:$0xff]
    %v217 = vld [vmem:[#allocation2 + $0x230] sm:$0xff]
    %v218 = vld [vmem:[#allocation2 + $0x258] sm:$0xff]
    %v219 = vld [vmem:[#allocation2 + $0x280] sm:$0xff]
    %v220 = vld [vmem:[#allocation2 + $0x2a8] sm:$0xff]
    %v221 = vld [vmem:[#allocation2 + $0x2d0] sm:$0xff]
    %v222 = vld [vmem:[#allocation2 + $0x2f8] sm:$0xff]
    %v223 = vld [vmem:[#allocation2 + $0x320] sm:$0xff]
    %v224 = vld [vmem:[#allocation2 + $0x348] sm:$0xff]
    %v225 = vld [vmem:[#allocation2 + $0x370] sm:$0xff]
    %v226 = vld [vmem:[#allocation2 + $0x398] sm:$0xff]
    %v227 = vld [vmem:[#allocation2 + $0x3c0] sm:$0xff]
    %v228 = vld [vmem:[#allocation2 + $0x3e8] sm:$0xff]
    %v229 = vld [vmem:[#allocation2 + $0x410] sm:$0xff]
    %v230 = vld [vmem:[#allocation2 + $0x438] sm:$0xff]
    %v231 = vld [vmem:[#allocation2 + $0x460] sm:$0xff]
    %v232 = vld [vmem:[#allocation2 + $0x488] sm:$0xff]
    %v233 = vld [vmem:[#allocation2 + $0x4b0] sm:$0xff]
    %v234 = vld [vmem:[#allocation2 + $0x4d8] sm:$0xff]
    %v267 = vunpack.c.l.b16 %v203
    %v268 = vunpack.c.h.b16 %v203
    %v269 = vunpack.c.l.b16 %v204
    %v270 = vunpack.c.h.b16 %v204
    %v271 = vunpack.c.l.b16 %v205
    %v272 = vunpack.c.h.b16 %v205
    %v273 = vunpack.c.l.b16 %v206
    %v274 = vunpack.c.h.b16 %v206
    %v275 = vunpack.c.l.b16 %v207
    %v276 = vunpack.c.h.b16 %v207
    %v277 = vunpack.c.l.b16 %v208
    %v278 = vunpack.c.h.b16 %v208
    %v279 = vunpack.c.l.b16 %v209
    %v280 = vunpack.c.h.b16 %v209
    %v281 = vunpack.c.l.b16 %v210
    %v282 = vunpack.c.h.b16 %v210
    %v283 = vunpack.c.l.b16 %v211
    %v284 = vunpack.c.h.b16 %v211
    %v285 = vunpack.c.l.b16 %v212
    %v286 = vunpack.c.h.b16 %v212
    %v287 = vunpack.c.l.b16 %v213
    %v288 = vunpack.c.h.b16 %v213
    %v289 = vunpack.c.l.b16 %v214
    %v290 = vunpack.c.h.b16 %v214
    %v291 = vunpack.c.l.b16 %v215
    %v292 = vunpack.c.h.b16 %v215
    %v293 = vunpack.c.l.b16 %v216
    %v294 = vunpack.c.h.b16 %v216
    %v295 = vunpack.c.l.b16 %v217
    %v296 = vunpack.c.h.b16 %v217
    %v297 = vunpack.c.l.b16 %v218
    %v298 = vunpack.c.h.b16 %v218
    %v299 = vunpack.c.l.b16 %v219
    %v300 = vunpack.c.h.b16 %v219
    %v301 = vunpack.c.l.b16 %v220
    %v302 = vunpack.c.h.b16 %v220
    %v303 = vunpack.c.l.b16 %v221
    %v304 = vunpack.c.h.b16 %v221
    %v305 = vunpack.c.l.b16 %v222
    %v306 = vunpack.c.h.b16 %v222
    %v307 = vunpack.c.l.b16 %v223
    %v308 = vunpack.c.h.b16 %v223
    %v309 = vunpack.c.l.b16 %v224
    %v310 = vunpack.c.h.b16 %v224
    %v311 = vunpack.c.l.b16 %v225
    %v312 = vunpack.c.h.b16 %v225
    %v313 = vunpack.c.l.b16 %v226
    %v314 = vunpack.c.h.b16 %v226
    %v315 = vunpack.c.l.b16 %v227
    %v316 = vunpack.c.h.b16 %v227
    %v317 = vunpack.c.l.b16 %v228
    %v318 = vunpack.c.h.b16 %v228
    %v319 = vunpack.c.l.b16 %v229
    %v320 = vunpack.c.h.b16 %v229
    %v321 = vunpack.c.l.b16 %v230
    %v322 = vunpack.c.h.b16 %v230
    %v323 = vunpack.c.l.b16 %v231
    %v324 = vunpack.c.h.b16 %v231
    %v325 = vunpack.c.l.b16 %v232
    %v326 = vunpack.c.h.b16 %v232
    %v327 = vunpack.c.l.b16 %v233
    %v328 = vunpack.c.h.b16 %v233
    %v329 = vunpack.c.l.b16 %v234
    %v330 = vunpack.c.h.b16 %v234
    %v331 = vpack.c.b16 %v269, %v267
    %v332 = vpack.c.b16 %v270, %v268
    %v333 = vpack.c.b16 %v273, %v271
    %v334 = vpack.c.b16 %v274, %v272
    %v335 = vpack.c.b16 %v277, %v275
    %v336 = vpack.c.b16 %v278, %v276
    %v337 = vpack.c.b16 %v281, %v279
    %v338 = vpack.c.b16 %v282, %v280
    %v339 = vpack.c.b16 %v285, %v283
    %v340 = vpack.c.b16 %v286, %v284
    %v341 = vpack.c.b16 %v289, %v287
    %v342 = vpack.c.b16 %v290, %v288
    %v343 = vpack.c.b16 %v293, %v291
    %v344 = vpack.c.b16 %v294, %v292
    %v345 = vpack.c.b16 %v297, %v295
    %v346 = vpack.c.b16 %v298, %v296
    %v347 = vpack.c.b16 %v301, %v299
    %v348 = vpack.c.b16 %v302, %v300
    %v349 = vpack.c.b16 %v305, %v303
    %v350 = vpack.c.b16 %v306, %v304
    %v351 = vpack.c.b16 %v309, %v307
    %v352 = vpack.c.b16 %v310, %v308
    %v353 = vpack.c.b16 %v313, %v311
    %v354 = vpack.c.b16 %v314, %v312
    %v355 = vpack.c.b16 %v317, %v315
    %v356 = vpack.c.b16 %v318, %v316
    %v357 = vpack.c.b16 %v321, %v319
    %v358 = vpack.c.b16 %v322, %v320
    %v359 = vpack.c.b16 %v325, %v323
    %v360 = vpack.c.b16 %v326, %v324
    %v361 = vpack.c.b16 %v329, %v327
    %v362 = vpack.c.b16 %v330, %v328
    %395 = vmatprep.subr.bf16.mxu0 %v332
    %396 = vmatpush1.bf16.msra.mxu0 %v331
    %397 = vmatprep.subr.bf16.mxu0 %v334
    %398 = vmatpush1.bf16.msra.mxu0 %v333
    %399 = vmatprep.subr.bf16.mxu0 %v336
    %400 = vmatpush1.bf16.msra.mxu0 %v335
    %401 = vmatprep.subr.bf16.mxu0 %v338
    %402 = vmatpush1.bf16.msra.mxu0 %v337
    %403 = vmatprep.subr.bf16.mxu0 %v340
    %404 = vmatpush1.bf16.msra.mxu0 %v339
    %405 = vmatprep.subr.bf16.mxu0 %v342
    %406 = vmatpush1.bf16.msra.mxu0 %v341
    %407 = vmatprep.subr.bf16.mxu0 %v344
    %408 = vmatpush1.bf16.msra.mxu0 %v343
    %409 = vmatprep.subr.bf16.mxu0 %v346
    %410 = vmatpush1.bf16.msra.mxu0 %v345
    %411 = vmatprep.subr.bf16.mxu0 %v348
    %412 = vmatpush1.bf16.msra.mxu0 %v347
    %413 = vmatprep.subr.bf16.mxu0 %v350
    %414 = vmatpush1.bf16.msra.mxu0 %v349
    %415 = vmatprep.subr.bf16.mxu0 %v352
    %416 = vmatpush1.bf16.msra.mxu0 %v351
    %417 = vmatprep.subr.bf16.mxu0 %v354
    %418 = vmatpush1.bf16.msra.mxu0 %v353
    %419 = vmatprep.subr.bf16.mxu0 %v356
    %420 = vmatpush1.bf16.msra.mxu0 %v355
    %421 = vmatprep.subr.bf16.mxu0 %v358
    %422 = vmatpush1.bf16.msra.mxu0 %v357
    %423 = vmatprep.subr.bf16.mxu0 %v360
    %424 = vmatpush1.bf16.msra.mxu0 %v359
    %425 = vmatprep.subr.bf16.mxu0 %v362
    %426 = vmatpush1.bf16.msra.mxu0 %v361
    %427 = vmatprep.mubr.bf16.mxu0 %v196
    %428 = vmatmul.mubr.bf16.gmra.mrb[0].mxu0 %v195
    %v429 = vpop.f32.mrb[0].mxu0
    %v430 = vadd.f32 0.0, %v429
    %v431 = vpop.f32.mrb[0].mxu0
    %v432 = vadd.f32 0.0, %v431
    %v433 = vpop.f32.mrb[0].mxu0
    %v434 = vadd.f32 0.0, %v433
    %v435 = vpop.f32.mrb[0].mxu0
    %v436 = vadd.f32 0.0, %v435
    %437 = vmatprep.mubr.bf16.mxu0 %v198
    %438 = vmatmul.mubr.bf16.gmra.mrb[0].mxu0 %v197
    %v439 = vpop.f32.mrb[0].mxu0
    %v440 = vadd.f32 0.0, %v439
    %v441 = vpop.f32.mrb[0].mxu0
    %v442 = vadd.f32 0.0, %v441
    %v443 = vpop.f32.mrb[0].mxu0
    %v444 = vadd.f32 0.0, %v443
    %v445 = vpop.f32.mrb[0].mxu0
    %v446 = vadd.f32 0.0, %v445
    %447 = vmatprep.mubr.bf16.mxu0 %v200
    %448 = vmatmul.mubr.bf16.gmra.mrb[0].mxu0 %v199
    %v449 = vpop.f32.mrb[0].mxu0
    %v450 = vadd.f32 0.0, %v449
    %v451 = vpop.f32.mrb[0].mxu0
    %v452 = vadd.f32 0.0, %v451
    %v453 = vpop.f32.mrb[0].mxu0
    %v454 = vadd.f32 0.0, %v453
    %v455 = vpop.f32.mrb[0].mxu0
    %v456 = vadd.f32 0.0, %v455
    %457 = vmatprep.mubr.bf16.mxu0 %v202
    %458 = vmatmul.mubr.bf16.gmra.mrb[0].mxu0 %v201
    %v459 = vpop.f32.mrb[0].mxu0
    %v460 = vadd.f32 0.0, %v459
    %v461 = vpop.f32.mrb[0].mxu0
    %v462 = vadd.f32 0.0, %v461
    %v463 = vpop.f32.mrb[0].mxu0
    %v464 = vpop.f32.mrb[0].mxu0
    %465 = vdwg.mxu0
    %v466 = vadd.f32 %v430, %v434
    %v467 = vadd.f32 %v466, %v440
    %v468 = vadd.f32 %v467, %v444
    %v469 = vadd.f32 %v468, %v450
    %v470 = vadd.f32 %v469, %v454
    %vm471 = vcmask 1040384
    %v472 = vsel %vm471, %v460, 0.0
    %v473 = vadd.f32 %v470, %v472
    %v474 = vrot.slane %v473, 4
    %v475 = vadd.f32 %v473, %v474
    %v476 = vrot.slane %v475, 2
    %v477 = vadd.f32 %v475, %v476
    %v478 = vrot.slane %v477, 1
    %v479 = vadd.f32 %v477, %v478
    %v480 = vadd.f32 %v432, %v436
    %v481 = vadd.f32 %v480, %v442
    %v482 = vadd.f32 %v481, %v446
    %v483 = vadd.f32 %v482, %v452
    %v484 = vadd.f32 %v483, %v456
    %v485 = vsel %vm471, %v462, 0.0
    %v486 = vadd.f32 %v484, %v485
    %v487 = vrot.slane %v486, 4
    %v488 = vadd.f32 %v486, %v487
    %v489 = vrot.slane %v488, 2
    %v490 = vadd.f32 %v488, %v489
    %v491 = vrot.slane %v490, 1
    %v492 = vadd.f32 %v490, %v491
    %v493 = vmul.f32 %v479, 0.020408163
    %v494 = vmul.f32 %v492, 0.020408163
    %v495 = vmul.f32 %v430, %v430
    %v496 = vmul.f32 %v432, %v432
    %v497 = vmul.f32 %v434, %v434
    %v498 = vmul.f32 %v436, %v436
    %v499 = vmul.f32 %v440, %v440
    %v500 = vmul.f32 %v442, %v442
    %v501 = vmul.f32 %v444, %v444
    %v502 = vmul.f32 %v446, %v446
    %v503 = vmul.f32 %v450, %v450
    %v504 = vmul.f32 %v452, %v452
    %v505 = vmul.f32 %v454, %v454
    %v506 = vmul.f32 %v456, %v456
    %v507 = vmul.f32 %v460, %v460
    %v508 = vmul.f32 %v462, %v462
    %v509 = vadd.f32 %v495, %v497
    %v510 = vadd.f32 %v509, %v499
    %v511 = vadd.f32 %v510, %v501
    %v512 = vadd.f32 %v511, %v503
    %v513 = vadd.f32 %v512, %v505
    %v514 = vsel %vm471, %v507, 0.0
    %v515 = vadd.f32 %v513, %v514
    %v516 = vrot.slane %v515, 4
    %v517 = vadd.f32 %v515, %v516
    %v518 = vrot.slane %v517, 2
    %v519 = vadd.f32 %v517, %v518
    %v520 = vrot.slane %v519, 1
    %v521 = vadd.f32 %v519, %v520
    %v522 = vadd.f32 %v496, %v498
    %v523 = vadd.f32 %v522, %v500
    %v524 = vadd.f32 %v523, %v502
    %v525 = vadd.f32 %v524, %v504
    %v526 = vadd.f32 %v525, %v506
    %v527 = vsel %vm471, %v508, 0.0
    %v528 = vadd.f32 %v526, %v527
    %v529 = vrot.slane %v528, 4
    %v530 = vadd.f32 %v528, %v529
    %v531 = vrot.slane %v530, 2
    %v532 = vadd.f32 %v530, %v531
    %v533 = vrot.slane %v532, 1
    %v534 = vadd.f32 %v532, %v533
    %v535 = vmul.f32 %v521, 0.020408163
    %v536 = vmul.f32 %v534, 0.020408163
    %v537 = vmul.f32 %v493, %v493
    %v538 = vmul.f32 %v494, %v494
    %v539 = vsub.f32 %v535, %v537
    %v540 = vsub.f32 %v536, %v538
    %v541 = vmax.f32 %v539, 0.0
    %v542 = vmax.f32 %v540, 0.0
    %v543 = vld [vmem:[%s3] sm:$0x3]
    %v544 = vadd.f32 %v541, 0.001
    %v545 = vadd.f32 %v542, 0.001
    %v546 = vrsqrt.pop %v544
    %v547 = vrsqrt.pop %v545
    %v550 = vcombine.low %v546, %v547
    %v552 = vunpack.c.l.s4 1966171168
    %v553 = vunpack.c.0.s8 %v552
    %v554 = vlaneseq
    %v555 = vshrl.u32 %v554, 7
    %v556 = vsub.s32 %v553, %v555
    %v557 = vrot.slane %v550, %v556
    %v559 = vunpack.c.l.s4 1966171168
    %v560 = vunpack.c.0.s8 %v559
    %v561 = vlaneseq
    %v562 = vshrl.u32 %v561, 7
    %v563 = vsub.s32 %v560, %v562
    %v564 = vrot.slane %v557, %v563
    %v566 = vmul.f32 %v543, %v564
    %v567 = vld [vmem:[%s4] sm:$0x3]
    %v569 = vlaneseq
    %v570 = vshrl.u32 %v569, 7
    %v571 = vsub.s32 0, %v570
    %v572 = vrot.slane %v566, %v571
    %v573 = vlaneseq
    %v574 = vshrl.u32 %v573, 7
    %v575 = vsub.s32 1, %v574
    %v576 = vrot.slane %v566, %v575
    %v579 = vmul.f32 %v493, %v572
    %v580 = vmul.f32 %v494, %v576
    %v583 = vcombine.low %v579, %v580
    %v585 = vunpack.c.l.s4 1966171168
    %v586 = vunpack.c.0.s8 %v585
    %v587 = vlaneseq
    %v588 = vshrl.u32 %v587, 7
    %v589 = vsub.s32 %v586, %v588
    %v590 = vrot.slane %v583, %v589
    %v592 = vunpack.c.l.s4 1966171168
    %v593 = vunpack.c.0.s8 %v592
    %v594 = vlaneseq
    %v595 = vshrl.u32 %v594, 7
    %v596 = vsub.s32 %v593, %v595
    %v597 = vrot.slane %v590, %v596
    %v599 = vsub.f32 %v567, %v597
    %v600 = vmul.f32 %v430, %v572
    %v601 = vmul.f32 %v432, %v576
    %v602 = vmul.f32 %v434, %v572
    %v603 = vmul.f32 %v436, %v576
    %v604 = vmul.f32 %v440, %v572
    %v605 = vmul.f32 %v442, %v576
    %v606 = vmul.f32 %v444, %v572
    %v607 = vmul.f32 %v446, %v576
    %v608 = vmul.f32 %v450, %v572
    %v609 = vmul.f32 %v452, %v576
    %v610 = vmul.f32 %v454, %v572
    %v611 = vmul.f32 %v456, %v576
    %v612 = vmul.f32 %v460, %v572
    %v613 = vmul.f32 %v462, %v576
    %v615 = vlaneseq
    %v616 = vshrl.u32 %v615, 7
    %v617 = vsub.s32 0, %v616
    %v618 = vrot.slane %v599, %v617
    %v619 = vlaneseq
    %v620 = vshrl.u32 %v619, 7
    %v621 = vsub.s32 1, %v620
    %v622 = vrot.slane %v599, %v621
    %v625 = vadd.f32 %v600, %v618
    %v626 = vadd.f32 %v601, %v622
    %v627 = vadd.f32 %v602, %v618
    %v628 = vadd.f32 %v603, %v622
    %v629 = vadd.f32 %v604, %v618
    %v630 = vadd.f32 %v605, %v622
    %v631 = vadd.f32 %v606, %v618
    %v632 = vadd.f32 %v607, %v622
    %v633 = vadd.f32 %v608, %v618
    %v634 = vadd.f32 %v609, %v622
    %v635 = vadd.f32 %v610, %v618
    %v636 = vadd.f32 %v611, %v622
    %v637 = vadd.f32 %v612, %v618
    %v638 = vadd.f32 %v613, %v622
    %v639 = vpack.c.bf16 %v627, %v625
    %v640 = vpack.c.bf16 %v628, %v626
    %v641 = vpack.c.bf16 %v631, %v629
    %v642 = vpack.c.bf16 %v632, %v630
    %v643 = vpack.c.bf16 %v635, %v633
    %v644 = vpack.c.bf16 %v636, %v634
    %v645 = vpack.c.bf16 %v637, %v637
    %v646 = vpack.c.bf16 %v638, %v638
    %v655 = vunpack.c.l.b16 %v639
    %v656 = vunpack.c.l.b16 %v640
    %v657 = vunpack.c.h.b16 %v639
    %v658 = vunpack.c.h.b16 %v640
    %v659 = vunpack.c.l.b16 %v641
    %v660 = vunpack.c.l.b16 %v642
    %v661 = vunpack.c.h.b16 %v641
    %v662 = vunpack.c.h.b16 %v642
    %v663 = vunpack.c.l.b16 %v643
    %v664 = vunpack.c.l.b16 %v644
    %v665 = vunpack.c.h.b16 %v643
    %v666 = vunpack.c.h.b16 %v644
    %v667 = vunpack.c.l.b16 %v645
    %v668 = vunpack.c.l.b16 %v646
    %v669 = vpack.c.b16 %v656, %v655
    %v670 = vpack.c.b16 %v658, %v657
    %v671 = vpack.c.b16 %v660, %v659
    %v672 = vpack.c.b16 %v662, %v661
    %v673 = vpack.c.b16 %v664, %v663
    %v674 = vpack.c.b16 %v666, %v665
    %v675 = vpack.c.b16 %v668, %v667
    %683 = vst [vmem:[#allocation5] sm:$0xff] %v669
    %684 = vst [vmem:[#allocation5 + $0x28] sm:$0xff] %v670
    %685 = vst [vmem:[#allocation5 + $0x50] sm:$0xff] %v671
    %686 = vst [vmem:[#allocation5 + $0x78] sm:$0xff] %v672
    %687 = vst [vmem:[#allocation5 + $0xa0] sm:$0xff] %v673
    %688 = vst [vmem:[#allocation5 + $0xc8] sm:$0xff] %v674
    %vm689 = vcmask 1040384
    %vm690 = vsmask.f32 256
    %vm691 = vmand %vm689, %vm690
    %vm692 = vcmask 1044484
    %vm693 = vsmask.f32 4352
    %vm694 = vmand %vm692, %vm693
    %vm695 = vmor %vm694, %vm691
    %v696 = vld [vmem:[#allocation5 + $0xf0] sm:$0x11]
    %v697 = vsel %vm695, %v675, %v696
    %698 = vst [vmem:[#allocation5 + $0xf0] sm:$0x11] %v697
    %v699 = vld [vmem:[#allocation2 + $0x8] sm:$0xff]
    %v700 = vld [vmem:[#allocation2 + $0x30] sm:$0xff]
    %v701 = vld [vmem:[#allocation2 + $0x58] sm:$0xff]
    %v702 = vld [vmem:[#allocation2 + $0x80] sm:$0xff]
    %v703 = vld [vmem:[#allocation2 + $0xa8] sm:$0xff]
    %v704 = vld [vmem:[#allocation2 + $0xd0] sm:$0xff]
    %v705 = vld [vmem:[#allocation2 + $0xf8] sm:$0xff]
    %v706 = vld [vmem:[#allocation2 + $0x120] sm:$0xff]
    %v707 = vld [vmem:[#allocation2 + $0x148] sm:$0xff]
    %v708 = vld [vmem:[#allocation2 + $0x170] sm:$0xff]
    %v709 = vld [vmem:[#allocation2 + $0x198] sm:$0xff]
    %v710 = vld [vmem:[#allocation2 + $0x1c0] sm:$0xff]
    %v711 = vld [vmem:[#allocation2 + $0x1e8] sm:$0xff]
    %v712 = vld [vmem:[#allocation2 + $0x210] sm:$0xff]
    %v713 = vld [vmem:[#allocation2 + $0x238] sm:$0xff]
    %v714 = vld [vmem:[#allocation2 + $0x260] sm:$0xff]
    %v715 = vld [vmem:[#allocation2 + $0x288] sm:$0xff]
    %v716 = vld [vmem:[#allocation2 + $0x2b0] sm:$0xff]
    %v717 = vld [vmem:[#allocation2 + $0x2d8] sm:$0xff]
    %v718 = vld [vmem:[#allocation2 + $0x300] sm:$0xff]
    %v719 = vld [vmem:[#allocation2 + $0x328] sm:$0xff]
    %v720 = vld [vmem:[#allocation2 + $0x350] sm:$0xff]
    %v721 = vld [vmem:[#allocation2 + $0x378] sm:$0xff]
    %v722 = vld [vmem:[#allocation2 + $0x3a0] sm:$0xff]
    %v723 = vld [vmem:[#allocation2 + $0x3c8] sm:$0xff]
    %v724 = vld [vmem:[#allocation2 + $0x3f0] sm:$0xff]
    %v725 = vld [vmem:[#allocation2 + $0x418] sm:$0xff]
    %v726 = vld [vmem:[#allocation2 + $0x440] sm:$0xff]
    %v727 = vld [vmem:[#allocation2 + $0x468] sm:$0xff]
    %v728 = vld [vmem:[#allocation2 + $0x490] sm:$0xff]
    %v729 = vld [vmem:[#allocation2 + $0x4b8] sm:$0xff]
    %v730 = vld [vmem:[#allocation2 + $0x4e0] sm:$0xff]
    %v763 = vunpack.c.l.b16 %v699
    %v764 = vunpack.c.h.b16 %v699
    %v765 = vunpack.c.l.b16 %v700
    %v766 = vunpack.c.h.b16 %v700
    %v767 = vunpack.c.l.b16 %v701
    %v768 = vunpack.c.h.b16 %v701
    %v769 = vunpack.c.l.b16 %v702
    %v770 = vunpack.c.h.b16 %v702
    %v771 = vunpack.c.l.b16 %v703
    %v772 = vunpack.c.h.b16 %v703
    %v773 = vunpack.c.l.b16 %v704
    %v774 = vunpack.c.h.b16 %v704
    %v775 = vunpack.c.l.b16 %v705
    %v776 = vunpack.c.h.b16 %v705
    %v777 = vunpack.c.l.b16 %v706
    %v778 = vunpack.c.h.b16 %v706
    %v779 = vunpack.c.l.b16 %v707
    %v780 = vunpack.c.h.b16 %v707
    %v781 = vunpack.c.l.b16 %v708
    %v782 = vunpack.c.h.b16 %v708
    %v783 = vunpack.c.l.b16 %v709
    %v784 = vunpack.c.h.b16 %v709
    %v785 = vunpack.c.l.b16 %v710
    %v786 = vunpack.c.h.b16 %v710
    %v787 = vunpack.c.l.b16 %v711
    %v788 = vunpack.c.h.b16 %v711
    %v789 = vunpack.c.l.b16 %v712
    %v790 = vunpack.c.h.b16 %v712
    %v791 = vunpack.c.l.b16 %v713
    %v792 = vunpack.c.h.b16 %v713
    %v793 = vunpack.c.l.b16 %v714
    %v794 = vunpack.c.h.b16 %v714
    %v795 = vunpack.c.l.b16 %v715
    %v796 = vunpack.c.h.b16 %v715
    %v797 = vunpack.c.l.b16 %v716
    %v798 = vunpack.c.h.b16 %v716
    %v799 = vunpack.c.l.b16 %v717
    %v800 = vunpack.c.h.b16 %v717
    %v801 = vunpack.c.l.b16 %v718
    %v802 = vunpack.c.h.b16 %v718
    %v803 = vunpack.c.l.b16 %v719
    %v804 = vunpack.c.h.b16 %v719
    %v805 = vunpack.c.l.b16 %v720
    %v806 = vunpack.c.h.b16 %v720
    %v807 = vunpack.c.l.b16 %v721
    %v808 = vunpack.c.h.b16 %v721
    %v809 = vunpack.c.l.b16 %v722
    %v810 = vunpack.c.h.b16 %v722
    %v811 = vunpack.c.l.b16 %v723
    %v812 = vunpack.c.h.b16 %v723
    %v813 = vunpack.c.l.b16 %v724
    %v814 = vunpack.c.h.b16 %v724
    %v815 = vunpack.c.l.b16 %v725
    %v816 = vunpack.c.h.b16 %v725
    %v817 = vunpack.c.l.b16 %v726
    %v818 = vunpack.c.h.b16 %v726
    %v819 = vunpack.c.l.b16 %v727
    %v820 = vunpack.c.h.b16 %v727
    %v821 = vunpack.c.l.b16 %v728
    %v822 = vunpack.c.h.b16 %v728
    %v823 = vunpack.c.l.b16 %v729
    %v824 = vunpack.c.h.b16 %v729
    %v825 = vunpack.c.l.b16 %v730
    %v826 = vunpack.c.h.b16 %v730
    %v827 = vpack.c.b16 %v765, %v763
    %v828 = vpack.c.b16 %v766, %v764
    %v829 = vpack.c.b16 %v769, %v767
    %v830 = vpack.c.b16 %v770, %v768
    %v831 = vpack.c.b16 %v773, %v771
    %v832 = vpack.c.b16 %v774, %v772
    %v833 = vpack.c.b16 %v777, %v775
    %v834 = vpack.c.b16 %v778, %v776
    %v835 = vpack.c.b16 %v781, %v779
    %v836 = vpack.c.b16 %v782, %v780
    %v837 = vpack.c.b16 %v785, %v783
    %v838 = vpack.c.b16 %v786, %v784
    %v839 = vpack.c.b16 %v789, %v787
    %v840 = vpack.c.b16 %v790, %v788
    %v841 = vpack.c.b16 %v793, %v791
    %v842 = vpack.c.b16 %v794, %v792
    %v843 = vpack.c.b16 %v797, %v795
    %v844 = vpack.c.b16 %v798, %v796
    %v845 = vpack.c.b16 %v801, %v799
    %v846 = vpack.c.b16 %v802, %v800
    %v847 = vpack.c.b16 %v805, %v803
    %v848 = vpack.c.b16 %v806, %v804
    %v849 = vpack.c.b16 %v809, %v807
    %v850 = vpack.c.b16 %v810, %v808
    %v851 = vpack.c.b16 %v813, %v811
    %v852 = vpack.c.b16 %v814, %v812
    %v853 = vpack.c.b16 %v817, %v815
    %v854 = vpack.c.b16 %v818, %v816
    %v855 = vpack.c.b16 %v821, %v819
    %v856 = vpack.c.b16 %v822, %v820
    %v857 = vpack.c.b16 %v825, %v823
    %v858 = vpack.c.b16 %v826, %v824
    %891 = vmatprep.subr.bf16.mxu0 %v828
    %892 = vmatpush1.bf16.msra.mxu0 %v827
    %893 = vmatprep.subr.bf16.mxu0 %v830
    %894 = vmatpush1.bf16.msra.mxu0 %v829
    %895 = vmatprep.subr.bf16.mxu0 %v832
    %896 = vmatpush1.bf16.msra.mxu0 %v831
    %897 = vmatprep.subr.bf16.mxu0 %v834
    %898 = vmatpush1.bf16.msra.mxu0 %v833
    %899 = vmatprep.subr.bf16.mxu0 %v836
    %900 = vmatpush1.bf16.msra.mxu0 %v835
    %901 = vmatprep.subr.bf16.mxu0 %v838
    %902 = vmatpush1.bf16.msra.mxu0 %v837
    %903 = vmatprep.subr.bf16.mxu0 %v840
    %904 = vmatpush1.bf16.msra.mxu0 %v839
    %905 = vmatprep.subr.bf16.mxu0 %v842
    %906 = vmatpush1.bf16.msra.mxu0 %v841
    %907 = vmatprep.subr.bf16.mxu0 %v844
    %908 = vmatpush1.bf16.msra.mxu0 %v843
    %909 = vmatprep.subr.bf16.mxu0 %v846
    %910 = vmatpush1.bf16.msra.mxu0 %v845
    %911 = vmatprep.subr.bf16.mxu0 %v848
    %912 = vmatpush1.bf16.msra.mxu0 %v847
    %913 = vmatprep.subr.bf16.mxu0 %v850
    %914 = vmatpush1.bf16.msra.mxu0 %v849
    %915 = vmatprep.subr.bf16.mxu0 %v852
    %916 = vmatpush1.bf16.msra.mxu0 %v851
    %917 = vmatprep.subr.bf16.mxu0 %v854
    %918 = vmatpush1.bf16.msra.mxu0 %v853
    %919 = vmatprep.subr.bf16.mxu0 %v856
    %920 = vmatpush1.bf16.msra.mxu0 %v855
    %921 = vmatprep.subr.bf16.mxu0 %v858
    %922 = vmatpush1.bf16.msra.mxu0 %v857
    %923 = vmatprep.mubr.bf16.mxu0 %v196
    %924 = vmatmul.mubr.bf16.gmra.mrb[0].mxu0 %v195
    %v925 = vpop.f32.mrb[0].mxu0
    %v926 = vadd.f32 0.0, %v925
    %v927 = vpop.f32.mrb[0].mxu0
    %v928 = vadd.f32 0.0, %v927
    %v929 = vpop.f32.mrb[0].mxu0
    %v930 = vadd.f32 0.0, %v929
    %v931 = vpop.f32.mrb[0].mxu0
    %v932 = vadd.f32 0.0, %v931
    %933 = vmatprep.mubr.bf16.mxu0 %v198
    %934 = vmatmul.mubr.bf16.gmra.mrb[0].mxu0 %v197
    %v935 = vpop.f32.mrb[0].mxu0
    %v936 = vadd.f32 0.0, %v935
    %v937 = vpop.f32.mrb[0].mxu0
    %v938 = vadd.f32 0.0, %v937
    %v939 = vpop.f32.mrb[0].mxu0
    %v940 = vadd.f32 0.0, %v939
    %v941 = vpop.f32.mrb[0].mxu0
    %v942 = vadd.f32 0.0, %v941
    %943 = vmatprep.mubr.bf16.mxu0 %v200
    %944 = vmatmul.mubr.bf16.gmra.mrb[0].mxu0 %v199
    %v945 = vpop.f32.mrb[0].mxu0
    %v946 = vadd.f32 0.0, %v945
    %v947 = vpop.f32.mrb[0].mxu0
    %v948 = vadd.f32 0.0, %v947
    %v949 = vpop.f32.mrb[0].mxu0
    %v950 = vadd.f32 0.0, %v949
    %v951 = vpop.f32.mrb[0].mxu0
    %v952 = vadd.f32 0.0, %v951
    %953 = vmatprep.mubr.bf16.mxu0 %v202
    %954 = vmatmul.mubr.bf16.gmra.mrb[0].mxu0 %v201
    %v955 = vpop.f32.mrb[0].mxu0
    %v956 = vadd.f32 0.0, %v955
    %v957 = vpop.f32.mrb[0].mxu0
    %v958 = vadd.f32 0.0, %v957
    %v959 = vpop.f32.mrb[0].mxu0
    %v960 = vpop.f32.mrb[0].mxu0
    %961 = vdwg.mxu0
    %v962 = vadd.f32 %v926, %v930
    %v963 = vadd.f32 %v962, %v936
    %v964 = vadd.f32 %v963, %v940
    %v965 = vadd.f32 %v964, %v946
    %v966 = vadd.f32 %v965, %v950
    %v967 = vsel %vm471, %v956, 0.0
    %v968 = vadd.f32 %v966, %v967
    %v969 = vrot.slane %v968, 4
    %v970 = vadd.f32 %v968, %v969
    %v971 = vrot.slane %v970, 2
    %v972 = vadd.f32 %v970, %v971
    %v973 = vrot.slane %v972, 1
    %v974 = vadd.f32 %v972, %v973
    %v975 = vadd.f32 %v928, %v932
    %v976 = vadd.f32 %v975, %v938
    %v977 = vadd.f32 %v976, %v942
    %v978 = vadd.f32 %v977, %v948
    %v979 = vadd.f32 %v978, %v952
    %v980 = vsel %vm471, %v958, 0.0
    %v981 = vadd.f32 %v979, %v980
    %v982 = vrot.slane %v981, 4
    %v983 = vadd.f32 %v981, %v982
    %v984 = vrot.slane %v983, 2
    %v985 = vadd.f32 %v983, %v984
    %v986 = vrot.slane %v985, 1
    %v987 = vadd.f32 %v985, %v986
    %v988 = vmul.f32 %v974, 0.020408163
    %v989 = vmul.f32 %v987, 0.020408163
    %v990 = vmul.f32 %v926, %v926
    %v991 = vmul.f32 %v928, %v928
    %v992 = vmul.f32 %v930, %v930
    %v993 = vmul.f32 %v932, %v932
    %v994 = vmul.f32 %v936, %v936
    %v995 = vmul.f32 %v938, %v938
    %v996 = vmul.f32 %v940, %v940
    %v997 = vmul.f32 %v942, %v942
    %v998 = vmul.f32 %v946, %v946
    %v999 = vmul.f32 %v948, %v948
    %v1000 = vmul.f32 %v950, %v950
    %v1001 = vmul.f32 %v952, %v952
    %v1002 = vmul.f32 %v956, %v956
    %v1003 = vmul.f32 %v958, %v958
    %v1004 = vadd.f32 %v990, %v992
    %v1005 = vadd.f32 %v1004, %v994
    %v1006 = vadd.f32 %v1005, %v996
    %v1007 = vadd.f32 %v1006, %v998
    %v1008 = vadd.f32 %v1007, %v1000
    %v1009 = vsel %vm471, %v1002, 0.0
    %v1010 = vadd.f32 %v1008, %v1009
    %v1011 = vrot.slane %v1010, 4
    %v1012 = vadd.f32 %v1010, %v1011
    %v1013 = vrot.slane %v1012, 2
    %v1014 = vadd.f32 %v1012, %v1013
    %v1015 = vrot.slane %v1014, 1
    %v1016 = vadd.f32 %v1014, %v1015
    %v1017 = vadd.f32 %v991, %v993
    %v1018 = vadd.f32 %v1017, %v995
    %v1019 = vadd.f32 %v1018, %v997
    %v1020 = vadd.f32 %v1019, %v999
    %v1021 = vadd.f32 %v1020, %v1001
    %v1022 = vsel %vm471, %v1003, 0.0
    %v1023 = vadd.f32 %v1021, %v1022
    %v1024 = vrot.slane %v1023, 4
    %v1025 = vadd.f32 %v1023, %v1024
    %v1026 = vrot.slane %v1025, 2
    %v1027 = vadd.f32 %v1025, %v1026
    %v1028 = vrot.slane %v1027, 1
    %v1029 = vadd.f32 %v1027, %v1028
    %v1030 = vmul.f32 %v1016, 0.020408163
    %v1031 = vmul.f32 %v1029, 0.020408163
    %v1032 = vmul.f32 %v988, %v988
    %v1033 = vmul.f32 %v989, %v989
    %v1034 = vsub.f32 %v1030, %v1032
    %v1035 = vsub.f32 %v1031, %v1033
    %v1036 = vmax.f32 %v1034, 0.0
    %v1037 = vmax.f32 %v1035, 0.0
    %v1038 = vld [vmem:[%s3 + $0x2] sm:$0x3]
    %v1039 = vadd.f32 %v1036, 0.001
    %v1040 = vadd.f32 %v1037, 0.001
    %v1041 = vrsqrt.pop %v1039
    %v1042 = vrsqrt.pop %v1040
    %v1045 = vcombine.low %v1041, %v1042
    %v1047 = vunpack.c.l.s4 1966171168
    %v1048 = vunpack.c.0.s8 %v1047
    %v1049 = vlaneseq
    %v1050 = vshrl.u32 %v1049, 7
    %v1051 = vsub.s32 %v1048, %v1050
    %v1052 = vrot.slane %v1045, %v1051
    %v1054 = vunpack.c.l.s4 1966171168
    %v1055 = vunpack.c.0.s8 %v1054
    %v1056 = vlaneseq
    %v1057 = vshrl.u32 %v1056, 7
    %v1058 = vsub.s32 %v1055, %v1057
    %v1059 = vrot.slane %v1052, %v1058
    %v1061 = vmul.f32 %v1038, %v1059
    %v1062 = vld [vmem:[%s4 + $0x2] sm:$0x3]
    %v1064 = vlaneseq
    %v1065 = vshrl.u32 %v1064, 7
    %v1066 = vsub.s32 0, %v1065
    %v1067 = vrot.slane %v1061, %v1066
    %v1068 = vlaneseq
    %v1069 = vshrl.u32 %v1068, 7
    %v1070 = vsub.s32 1, %v1069
    %v1071 = vrot.slane %v1061, %v1070
    %v1074 = vmul.f32 %v988, %v1067
    %v1075 = vmul.f32 %v989, %v1071
    %v1078 = vcombine.low %v1074, %v1075
    %v1080 = vunpack.c.l.s4 1966171168
    %v1081 = vunpack.c.0.s8 %v1080
    %v1082 = vlaneseq
    %v1083 = vshrl.u32 %v1082, 7
    %v1084 = vsub.s32 %v1081, %v1083
    %v1085 = vrot.slane %v1078, %v1084
    %v1087 = vunpack.c.l.s4 1966171168
    %v1088 = vunpack.c.0.s8 %v1087
    %v1089 = vlaneseq
    %v1090 = vshrl.u32 %v1089, 7
    %v1091 = vsub.s32 %v1088, %v1090
    %v1092 = vrot.slane %v1085, %v1091
    %v1094 = vsub.f32 %v1062, %v1092
    %v1095 = vmul.f32 %v926, %v1067
    %v1096 = vmul.f32 %v928, %v1071
    %v1097 = vmul.f32 %v930, %v1067
    %v1098 = vmul.f32 %v932, %v1071
    %v1099 = vmul.f32 %v936, %v1067
    %v1100 = vmul.f32 %v938, %v1071
    %v1101 = vmul.f32 %v940, %v1067
    %v1102 = vmul.f32 %v942, %v1071
    %v1103 = vmul.f32 %v946, %v1067
    %v1104 = vmul.f32 %v948, %v1071
    %v1105 = vmul.f32 %v950, %v1067
    %v1106 = vmul.f32 %v952, %v1071
    %v1107 = vmul.f32 %v956, %v1067
    %v1108 = vmul.f32 %v958, %v1071
    %v1110 = vlaneseq
    %v1111 = vshrl.u32 %v1110, 7
    %v1112 = vsub.s32 0, %v1111
    %v1113 = vrot.slane %v1094, %v1112
    %v1114 = vlaneseq
    %v1115 = vshrl.u32 %v1114, 7
    %v1116 = vsub.s32 1, %v1115
    %v1117 = vrot.slane %v1094, %v1116
    %v1120 = vadd.f32 %v1095, %v1113
    %v1121 = vadd.f32 %v1096, %v1117
    %v1122 = vadd.f32 %v1097, %v1113
    %v1123 = vadd.f32 %v1098, %v1117
    %v1124 = vadd.f32 %v1099, %v1113
    %v1125 = vadd.f32 %v1100, %v1117
    %v1126 = vadd.f32 %v1101, %v1113
    %v1127 = vadd.f32 %v1102, %v1117
    %v1128 = vadd.f32 %v1103, %v1113
    %v1129 = vadd.f32 %v1104, %v1117
    %v1130 = vadd.f32 %v1105, %v1113
    %v1131 = vadd.f32 %v1106, %v1117
    %v1132 = vadd.f32 %v1107, %v1113
    %v1133 = vadd.f32 %v1108, %v1117
    %v1134 = vpack.c.bf16 %v1122, %v1120
    %v1135 = vpack.c.bf16 %v1123, %v1121
    %v1136 = vpack.c.bf16 %v1126, %v1124
    %v1137 = vpack.c.bf16 %v1127, %v1125
    %v1138 = vpack.c.bf16 %v1130, %v1128
    %v1139 = vpack.c.bf16 %v1131, %v1129
    %v1140 = vpack.c.bf16 %v1132, %v1132
    %v1141 = vpack.c.bf16 %v1133, %v1133
    %v1150 = vunpack.c.l.b16 %v1134
    %v1151 = vunpack.c.l.b16 %v1135
    %v1152 = vunpack.c.h.b16 %v1134
    %v1153 = vunpack.c.h.b16 %v1135
    %v1154 = vunpack.c.l.b16 %v1136
    %v1155 = vunpack.c.l.b16 %v1137
    %v1156 = vunpack.c.h.b16 %v1136
    %v1157 = vunpack.c.h.b16 %v1137
    %v1158 = vunpack.c.l.b16 %v1138
    %v1159 = vunpack.c.l.b16 %v1139
    %v1160 = vunpack.c.h.b16 %v1138
    %v1161 = vunpack.c.h.b16 %v1139
    %v1162 = vunpack.c.l.b16 %v1140
    %v1163 = vunpack.c.l.b16 %v1141
    %v1164 = vpack.c.b16 %v1151, %v1150
    %v1165 = vpack.c.b16 %v1153, %v1152
    %v1166 = vpack.c.b16 %v1155, %v1154
    %v1167 = vpack.c.b16 %v1157, %v1156
    %v1168 = vpack.c.b16 %v1159, %v1158
    %v1169 = vpack.c.b16 %v1161, %v1160
    %v1170 = vpack.c.b16 %v1163, %v1162
    %1178 = vst [vmem:[#allocation5 + $0x8] sm:$0xff] %v1164
    %1179 = vst [vmem:[#allocation5 + $0x30] sm:$0xff] %v1165
    %1180 = vst [vmem:[#allocation5 + $0x58] sm:$0xff] %v1166
    %1181 = vst [vmem:[#allocation5 + $0x80] sm:$0xff] %v1167
    %1182 = vst [vmem:[#allocation5 + $0xa8] sm:$0xff] %v1168
    %1183 = vst [vmem:[#allocation5 + $0xd0] sm:$0xff] %v1169
    %v1184 = vld [vmem:[#allocation5 + $0xf8] sm:$0x11]
    %v1185 = vsel %vm695, %v1170, %v1184
    %1186 = vst [vmem:[#allocation5 + $0xf8] sm:$0x11] %v1185
    %v1187 = vld [vmem:[#allocation2 + $0x10] sm:$0xff]
    %v1188 = vld [vmem:[#allocation2 + $0x38] sm:$0xff]
    %v1189 = vld [vmem:[#allocation2 + $0x60] sm:$0xff]
    %v1190 = vld [vmem:[#allocation2 + $0x88] sm:$0xff]
    %v1191 = vld [vmem:[#allocation2 + $0xb0] sm:$0xff]
    %v1192 = vld [vmem:[#allocation2 + $0xd8] sm:$0xff]
    %v1193 = vld [vmem:[#allocation2 + $0x100] sm:$0xff]
    %v1194 = vld [vmem:[#allocation2 + $0x128] sm:$0xff]
    %v1195 = vld [vmem:[#allocation2 + $0x150] sm:$0xff]
    %v1196 = vld [vmem:[#allocation2 + $0x178] sm:$0xff]
    %v1197 = vld [vmem:[#allocation2 + $0x1a0] sm:$0xff]
    %v1198 = vld [vmem:[#allocation2 + $0x1c8] sm:$0xff]
    %v1199 = vld [vmem:[#allocation2 + $0x1f0] sm:$0xff]
    %v1200 = vld [vmem:[#allocation2 + $0x218] sm:$0xff]
    %v1201 = vld [vmem:[#allocation2 + $0x240] sm:$0xff]
    %v1202 = vld [vmem:[#allocation2 + $0x268] sm:$0xff]
    %v1203 = vld [vmem:[#allocation2 + $0x290] sm:$0xff]
    %v1204 = vld [vmem:[#allocation2 + $0x2b8] sm:$0xff]
    %v1205 = vld [vmem:[#allocation2 + $0x2e0] sm:$0xff]
    %v1206 = vld [vmem:[#allocation2 + $0x308] sm:$0xff]
    %v1207 = vld [vmem:[#allocation2 + $0x330] sm:$0xff]
    %v1208 = vld [vmem:[#allocation2 + $0x358] sm:$0xff]
    %v1209 = vld [vmem:[#allocation2 + $0x380] sm:$0xff]
    %v1210 = vld [vmem:[#allocation2 + $0x3a8] sm:$0xff]
    %v1211 = vld [vmem:[#allocation2 + $0x3d0] sm:$0xff]
    %v1212 = vld [vmem:[#allocation2 + $0x3f8] sm:$0xff]
    %v1213 = vld [vmem:[#allocation2 + $0x420] sm:$0xff]
    %v1214 = vld [vmem:[#allocation2 + $0x448] sm:$0xff]
    %v1215 = vld [vmem:[#allocation2 + $0x470] sm:$0xff]
    %v1216 = vld [vmem:[#allocation2 + $0x498] sm:$0xff]
    %v1217 = vld [vmem:[#allocation2 + $0x4c0] sm:$0xff]
    %v1218 = vld [vmem:[#allocation2 + $0x4e8] sm:$0xff]
    %v1251 = vunpack.c.l.b16 %v1187
    %v1252 = vunpack.c.h.b16 %v1187
    %v1253 = vunpack.c.l.b16 %v1188
    %v1254 = vunpack.c.h.b16 %v1188
    %v1255 = vunpack.c.l.b16 %v1189
    %v1256 = vunpack.c.h.b16 %v1189
    %v1257 = vunpack.c.l.b16 %v1190
    %v1258 = vunpack.c.h.b16 %v1190
    %v1259 = vunpack.c.l.b16 %v1191
    %v1260 = vunpack.c.h.b16 %v1191
    %v1261 = vunpack.c.l.b16 %v1192
    %v1262 = vunpack.c.h.b16 %v1192
    %v1263 = vunpack.c.l.b16 %v1193
    %v1264 = vunpack.c.h.b16 %v1193
    %v1265 = vunpack.c.l.b16 %v1194
    %v1266 = vunpack.c.h.b16 %v1194
    %v1267 = vunpack.c.l.b16 %v1195
    %v1268 = vunpack.c.h.b16 %v1195
    %v1269 = vunpack.c.l.b16 %v1196
    %v1270 = vunpack.c.h.b16 %v1196
    %v1271 = vunpack.c.l.b16 %v1197
    %v1272 = vunpack.c.h.b16 %v1197
    %v1273 = vunpack.c.l.b16 %v1198
    %v1274 = vunpack.c.h.b16 %v1198
    %v1275 = vunpack.c.l.b16 %v1199
    %v1276 = vunpack.c.h.b16 %v1199
    %v1277 = vunpack.c.l.b16 %v1200
    %v1278 = vunpack.c.h.b16 %v1200
    %v1279 = vunpack.c.l.b16 %v1201
    %v1280 = vunpack.c.h.b16 %v1201
    %v1281 = vunpack.c.l.b16 %v1202
    %v1282 = vunpack.c.h.b16 %v1202
    %v1283 = vunpack.c.l.b16 %v1203
    %v1284 = vunpack.c.h.b16 %v1203
    %v1285 = vunpack.c.l.b16 %v1204
    %v1286 = vunpack.c.h.b16 %v1204
    %v1287 = vunpack.c.l.b16 %v1205
    %v1288 = vunpack.c.h.b16 %v1205
    %v1289 = vunpack.c.l.b16 %v1206
    %v1290 = vunpack.c.h.b16 %v1206
    %v1291 = vunpack.c.l.b16 %v1207
    %v1292 = vunpack.c.h.b16 %v1207
    %v1293 = vunpack.c.l.b16 %v1208
    %v1294 = vunpack.c.h.b16 %v1208
    %v1295 = vunpack.c.l.b16 %v1209
    %v1296 = vunpack.c.h.b16 %v1209
    %v1297 = vunpack.c.l.b16 %v1210
    %v1298 = vunpack.c.h.b16 %v1210
    %v1299 = vunpack.c.l.b16 %v1211
    %v1300 = vunpack.c.h.b16 %v1211
    %v1301 = vunpack.c.l.b16 %v1212
    %v1302 = vunpack.c.h.b16 %v1212
    %v1303 = vunpack.c.l.b16 %v1213
    %v1304 = vunpack.c.h.b16 %v1213
    %v1305 = vunpack.c.l.b16 %v1214
    %v1306 = vunpack.c.h.b16 %v1214
    %v1307 = vunpack.c.l.b16 %v1215
    %v1308 = vunpack.c.h.b16 %v1215
    %v1309 = vunpack.c.l.b16 %v1216
    %v1310 = vunpack.c.h.b16 %v1216
    %v1311 = vunpack.c.l.b16 %v1217
    %v1312 = vunpack.c.h.b16 %v1217
    %v1313 = vunpack.c.l.b16 %v1218
    %v1314 = vunpack.c.h.b16 %v1218
    %v1315 = vpack.c.b16 %v1253, %v1251
    %v1316 = vpack.c.b16 %v1254, %v1252
    %v1317 = vpack.c.b16 %v1257, %v1255
    %v1318 = vpack.c.b16 %v1258, %v1256
    %v1319 = vpack.c.b16 %v1261, %v1259
    %v1320 = vpack.c.b16 %v1262, %v1260
    %v1321 = vpack.c.b16 %v1265, %v1263
    %v1322 = vpack.c.b16 %v1266, %v1264
    %v1323 = vpack.c.b16 %v1269, %v1267
    %v1324 = vpack.c.b16 %v1270, %v1268
    %v1325 = vpack.c.b16 %v1273, %v1271
    %v1326 = vpack.c.b16 %v1274, %v1272
    %v1327 = vpack.c.b16 %v1277, %v1275
    %v1328 = vpack.c.b16 %v1278, %v1276
    %v1329 = vpack.c.b16 %v1281, %v1279
    %v1330 = vpack.c.b16 %v1282, %v1280
    %v1331 = vpack.c.b16 %v1285, %v1283
    %v1332 = vpack.c.b16 %v1286, %v1284
    %v1333 = vpack.c.b16 %v1289, %v1287
    %v1334 = vpack.c.b16 %v1290, %v1288
    %v1335 = vpack.c.b16 %v1293, %v1291
    %v1336 = vpack.c.b16 %v1294, %v1292
    %v1337 = vpack.c.b16 %v1297, %v1295
    %v1338 = vpack.c.b16 %v1298, %v1296
    %v1339 = vpack.c.b16 %v1301, %v1299
    %v1340 = vpack.c.b16 %v1302, %v1300
    %v1341 = vpack.c.b16 %v1305, %v1303
    %v1342 = vpack.c.b16 %v1306, %v1304
    %v1343 = vpack.c.b16 %v1309, %v1307
    %v1344 = vpack.c.b16 %v1310, %v1308
    %v1345 = vpack.c.b16 %v1313, %v1311
    %v1346 = vpack.c.b16 %v1314, %v1312
    %1379 = vmatprep.subr.bf16.mxu0 %v1316
    %1380 = vmatpush1.bf16.msra.mxu0 %v1315
    %1381 = vmatprep.subr.bf16.mxu0 %v1318
    %1382 = vmatpush1.bf16.msra.mxu0 %v1317
    %1383 = vmatprep.subr.bf16.mxu0 %v1320
    %1384 = vmatpush1.bf16.msra.mxu0 %v1319
    %1385 = vmatprep.subr.bf16.mxu0 %v1322
    %1386 = vmatpush1.bf16.msra.mxu0 %v1321
    %1387 = vmatprep.subr.bf16.mxu0 %v1324
    %1388 = vmatpush1.bf16.msra.mxu0 %v1323
    %1389 = vmatprep.subr.bf16.mxu0 %v1326
    %1390 = vmatpush1.bf16.msra.mxu0 %v1325
    %1391 = vmatprep.subr.bf16.mxu0 %v1328
    %1392 = vmatpush1.bf16.msra.mxu0 %v1327
    %1393 = vmatprep.subr.bf16.mxu0 %v1330
    %1394 = vmatpush1.bf16.msra.mxu0 %v1329
    %1395 = vmatprep.subr.bf16.mxu0 %v1332
    %1396 = vmatpush1.bf16.msra.mxu0 %v1331
    %1397 = vmatprep.subr.bf16.mxu0 %v1334
    %1398 = vmatpush1.bf16.msra.mxu0 %v1333
    %1399 = vmatprep.subr.bf16.mxu0 %v1336
    %1400 = vmatpush1.bf16.msra.mxu0 %v1335
    %1401 = vmatprep.subr.bf16.mxu0 %v1338
    %1402 = vmatpush1.bf16.msra.mxu0 %v1337
    %1403 = vmatprep.subr.bf16.mxu0 %v1340
    %1404 = vmatpush1.bf16.msra.mxu0 %v1339
    %1405 = vmatprep.subr.bf16.mxu0 %v1342
    %1406 = vmatpush1.bf16.msra.mxu0 %v1341
    %1407 = vmatprep.subr.bf16.mxu0 %v1344
    %1408 = vmatpush1.bf16.msra.mxu0 %v1343
    %1409 = vmatprep.subr.bf16.mxu0 %v1346
    %1410 = vmatpush1.bf16.msra.mxu0 %v1345
    %1411 = vmatprep.mubr.bf16.mxu0 %v196
    %1412 = vmatmul.mubr.bf16.gmra.mrb[0].mxu0 %v195
    %v1413 = vpop.f32.mrb[0].mxu0
    %v1414 = vadd.f32 0.0, %v1413
    %v1415 = vpop.f32.mrb[0].mxu0
    %v1416 = vadd.f32 0.0, %v1415
    %v1417 = vpop.f32.mrb[0].mxu0
    %v1418 = vadd.f32 0.0, %v1417
    %v1419 = vpop.f32.mrb[0].mxu0
    %v1420 = vadd.f32 0.0, %v1419
    %1421 = vmatprep.mubr.bf16.mxu0 %v198
    %1422 = vmatmul.mubr.bf16.gmra.mrb[0].mxu0 %v197
    %v1423 = vpop.f32.mrb[0].mxu0
    %v1424 = vadd.f32 0.0, %v1423
    %v1425 = vpop.f32.mrb[0].mxu0
    %v1426 = vadd.f32 0.0, %v1425
    %v1427 = vpop.f32.mrb[0].mxu0
    %v1428 = vadd.f32 0.0, %v1427
    %v1429 = vpop.f32.mrb[0].mxu0
    %v1430 = vadd.f32 0.0, %v1429
    %1431 = vmatprep.mubr.bf16.mxu0 %v200
    %1432 = vmatmul.mubr.bf16.gmra.mrb[0].mxu0 %v199
    %v1433 = vpop.f32.mrb[0].mxu0
    %v1434 = vadd.f32 0.0, %v1433
    %v1435 = vpop.f32.mrb[0].mxu0
    %v1436 = vadd.f32 0.0, %v1435
    %v1437 = vpop.f32.mrb[0].mxu0
    %v1438 = vadd.f32 0.0, %v1437
    %v1439 = vpop.f32.mrb[0].mxu0
    %v1440 = vadd.f32 0.0, %v1439
    %1441 = vmatprep.mubr.bf16.mxu0 %v202
    %1442 = vmatmul.mubr.bf16.gmra.mrb[0].mxu0 %v201
    %v1443 = vpop.f32.mrb[0].mxu0
    %v1444 = vadd.f32 0.0, %v1443
    %v1445 = vpop.f32.mrb[0].mxu0
    %v1446 = vadd.f32 0.0, %v1445
    %v1447 = vpop.f32.mrb[0].mxu0
    %v1448 = vpop.f32.mrb[0].mxu0
    %1449 = vdwg.mxu0
    %v1450 = vadd.f32 %v1414, %v1418
    %v1451 = vadd.f32 %v1450, %v1424
    %v1452 = vadd.f32 %v1451, %v1428
    %v1453 = vadd.f32 %v1452, %v1434
    %v1454 = vadd.f32 %v1453, %v1438
    %v1455 = vsel %vm471, %v1444, 0.0
    %v1456 = vadd.f32 %v1454, %v1455
    %v1457 = vrot.slane %v1456, 4
    %v1458 = vadd.f32 %v1456, %v1457
    %v1459 = vrot.slane %v1458, 2
    %v1460 = vadd.f32 %v1458, %v1459
    %v1461 = vrot.slane %v1460, 1
    %v1462 = vadd.f32 %v1460, %v1461
    %v1463 = vadd.f32 %v1416, %v1420
    %v1464 = vadd.f32 %v1463, %v1426
    %v1465 = vadd.f32 %v1464, %v1430
    %v1466 = vadd.f32 %v1465, %v1436
    %v1467 = vadd.f32 %v1466, %v1440
    %v1468 = vsel %vm471, %v1446, 0.0
    %v1469 = vadd.f32 %v1467, %v1468
    %v1470 = vrot.slane %v1469, 4
    %v1471 = vadd.f32 %v1469, %v1470
    %v1472 = vrot.slane %v1471, 2
    %v1473 = vadd.f32 %v1471, %v1472
    %v1474 = vrot.slane %v1473, 1
    %v1475 = vadd.f32 %v1473, %v1474
    %v1476 = vmul.f32 %v1462, 0.020408163
    %v1477 = vmul.f32 %v1475, 0.020408163
    %v1478 = vmul.f32 %v1414, %v1414
    %v1479 = vmul.f32 %v1416, %v1416
    %v1480 = vmul.f32 %v1418, %v1418
    %v1481 = vmul.f32 %v1420, %v1420
    %v1482 = vmul.f32 %v1424, %v1424
    %v1483 = vmul.f32 %v1426, %v1426
    %v1484 = vmul.f32 %v1428, %v1428
    %v1485 = vmul.f32 %v1430, %v1430
    %v1486 = vmul.f32 %v1434, %v1434
    %v1487 = vmul.f32 %v1436, %v1436
    %v1488 = vmul.f32 %v1438, %v1438
    %v1489 = vmul.f32 %v1440, %v1440
    %v1490 = vmul.f32 %v1444, %v1444
    %v1491 = vmul.f32 %v1446, %v1446
    %v1492 = vadd.f32 %v1478, %v1480
    %v1493 = vadd.f32 %v1492, %v1482
    %v1494 = vadd.f32 %v1493, %v1484
    %v1495 = vadd.f32 %v1494, %v1486
    %v1496 = vadd.f32 %v1495, %v1488
    %v1497 = vsel %vm471, %v1490, 0.0
    %v1498 = vadd.f32 %v1496, %v1497
    %v1499 = vrot.slane %v1498, 4
    %v1500 = vadd.f32 %v1498, %v1499
    %v1501 = vrot.slane %v1500, 2
    %v1502 = vadd.f32 %v1500, %v1501
    %v1503 = vrot.slane %v1502, 1
    %v1504 = vadd.f32 %v1502, %v1503
    %v1505 = vadd.f32 %v1479, %v1481
    %v1506 = vadd.f32 %v1505, %v1483
    %v1507 = vadd.f32 %v1506, %v1485
    %v1508 = vadd.f32 %v1507, %v1487
    %v1509 = vadd.f32 %v1508, %v1489
    %v1510 = vsel %vm471, %v1491, 0.0
    %v1511 = vadd.f32 %v1509, %v1510
    %v1512 = vrot.slane %v1511, 4
    %v1513 = vadd.f32 %v1511, %v1512
    %v1514 = vrot.slane %v1513, 2
    %v1515 = vadd.f32 %v1513, %v1514
    %v1516 = vrot.slane %v1515, 1
    %v1517 = vadd.f32 %v1515, %v1516
    %v1518 = vmul.f32 %v1504, 0.020408163
    %v1519 = vmul.f32 %v1517, 0.020408163
    %v1520 = vmul.f32 %v1476, %v1476
    %v1521 = vmul.f32 %v1477, %v1477
    %v1522 = vsub.f32 %v1518, %v1520
    %v1523 = vsub.f32 %v1519, %v1521
    %v1524 = vmax.f32 %v1522, 0.0
    %v1525 = vmax.f32 %v1523, 0.0
    %v1526 = vld [vmem:[%s3 + $0x4] sm:$0x3]
    %v1527 = vadd.f32 %v1524, 0.001
    %v1528 = vadd.f32 %v1525, 0.001
    %v1529 = vrsqrt.pop %v1527
    %v1530 = vrsqrt.pop %v1528
    %v1533 = vcombine.low %v1529, %v1530
    %v1535 = vunpack.c.l.s4 1966171168
    %v1536 = vunpack.c.0.s8 %v1535
    %v1537 = vlaneseq
    %v1538 = vshrl.u32 %v1537, 7
    %v1539 = vsub.s32 %v1536, %v1538
    %v1540 = vrot.slane %v1533, %v1539
    %v1542 = vunpack.c.l.s4 1966171168
    %v1543 = vunpack.c.0.s8 %v1542
    %v1544 = vlaneseq
    %v1545 = vshrl.u32 %v1544, 7
    %v1546 = vsub.s32 %v1543, %v1545
    %v1547 = vrot.slane %v1540, %v1546
    %v1549 = vmul.f32 %v1526, %v1547
    %v1550 = vld [vmem:[%s4 + $0x4] sm:$0x3]
    %v1552 = vlaneseq
    %v1553 = vshrl.u32 %v1552, 7
    %v1554 = vsub.s32 0, %v1553
    %v1555 = vrot.slane %v1549, %v1554
    %v1556 = vlaneseq
    %v1557 = vshrl.u32 %v1556, 7
    %v1558 = vsub.s32 1, %v1557
    %v1559 = vrot.slane %v1549, %v1558
    %v1562 = vmul.f32 %v1476, %v1555
    %v1563 = vmul.f32 %v1477, %v1559
    %v1566 = vcombine.low %v1562, %v1563
    %v1568 = vunpack.c.l.s4 1966171168
    %v1569 = vunpack.c.0.s8 %v1568
    %v1570 = vlaneseq
    %v1571 = vshrl.u32 %v1570, 7
    %v1572 = vsub.s32 %v1569, %v1571
    %v1573 = vrot.slane %v1566, %v1572
    %v1575 = vunpack.c.l.s4 1966171168
    %v1576 = vunpack.c.0.s8 %v1575
    %v1577 = vlaneseq
    %v1578 = vshrl.u32 %v1577, 7
    %v1579 = vsub.s32 %v1576, %v1578
    %v1580 = vrot.slane %v1573, %v1579
    %v1582 = vsub.f32 %v1550, %v1580
    %v1583 = vmul.f32 %v1414, %v1555
    %v1584 = vmul.f32 %v1416, %v1559
    %v1585 = vmul.f32 %v1418, %v1555
    %v1586 = vmul.f32 %v1420, %v1559
    %v1587 = vmul.f32 %v1424, %v1555
    %v1588 = vmul.f32 %v1426, %v1559
    %v1589 = vmul.f32 %v1428, %v1555
    %v1590 = vmul.f32 %v1430, %v1559
    %v1591 = vmul.f32 %v1434, %v1555
    %v1592 = vmul.f32 %v1436, %v1559
    %v1593 = vmul.f32 %v1438, %v1555
    %v1594 = vmul.f32 %v1440, %v1559
    %v1595 = vmul.f32 %v1444, %v1555
    %v1596 = vmul.f32 %v1446, %v1559
    %v1598 = vlaneseq
    %v1599 = vshrl.u32 %v1598, 7
    %v1600 = vsub.s32 0, %v1599
    %v1601 = vrot.slane %v1582, %v1600
    %v1602 = vlaneseq
    %v1603 = vshrl.u32 %v1602, 7
    %v1604 = vsub.s32 1, %v1603
    %v1605 = vrot.slane %v1582, %v1604
    %v1608 = vadd.f32 %v1583, %v1601
    %v1609 = vadd.f32 %v1584, %v1605
    %v1610 = vadd.f32 %v1585, %v1601
    %v1611 = vadd.f32 %v1586, %v1605
    %v1612 = vadd.f32 %v1587, %v1601
    %v1613 = vadd.f32 %v1588, %v1605
    %v1614 = vadd.f32 %v1589, %v1601
    %v1615 = vadd.f32 %v1590, %v1605
    %v1616 = vadd.f32 %v1591, %v1601
    %v1617 = vadd.f32 %v1592, %v1605
    %v1618 = vadd.f32 %v1593, %v1601
    %v1619 = vadd.f32 %v1594, %v1605
    %v1620 = vadd.f32 %v1595, %v1601
    %v1621 = vadd.f32 %v1596, %v1605
    %v1622 = vpack.c.bf16 %v1610, %v1608
    %v1623 = vpack.c.bf16 %v1611, %v1609
    %v1624 = vpack.c.bf16 %v1614, %v1612
    %v1625 = vpack.c.bf16 %v1615, %v1613
    %v1626 = vpack.c.bf16 %v1618, %v1616
    %v1627 = vpack.c.bf16 %v1619, %v1617
    %v1628 = vpack.c.bf16 %v1620, %v1620
    %v1629 = vpack.c.bf16 %v1621, %v1621
    %v1638 = vunpack.c.l.b16 %v1622
    %v1639 = vunpack.c.l.b16 %v1623
    %v1640 = vunpack.c.h.b16 %v1622
    %v1641 = vunpack.c.h.b16 %v1623
    %v1642 = vunpack.c.l.b16 %v1624
    %v1643 = vunpack.c.l.b16 %v1625
    %v1644 = vunpack.c.h.b16 %v1624
    %v1645 = vunpack.c.h.b16 %v1625
    %v1646 = vunpack.c.l.b16 %v1626
    %v1647 = vunpack.c.l.b16 %v1627
    %v1648 = vunpack.c.h.b16 %v1626
    %v1649 = vunpack.c.h.b16 %v1627
    %v1650 = vunpack.c.l.b16 %v1628
    %v1651 = vunpack.c.l.b16 %v1629
    %v1652 = vpack.c.b16 %v1639, %v1638
    %v1653 = vpack.c.b16 %v1641, %v1640
    %v1654 = vpack.c.b16 %v1643, %v1642
    %v1655 = vpack.c.b16 %v1645, %v1644
    %v1656 = vpack.c.b16 %v1647, %v1646
    %v1657 = vpack.c.b16 %v1649, %v1648
    %v1658 = vpack.c.b16 %v1651, %v1650
    %1666 = vst [vmem:[#allocation5 + $0x10] sm:$0xff] %v1652
    %1667 = vst [vmem:[#allocation5 + $0x38] sm:$0xff] %v1653
    %1668 = vst [vmem:[#allocation5 + $0x60] sm:$0xff] %v1654
    %1669 = vst [vmem:[#allocation5 + $0x88] sm:$0xff] %v1655
    %1670 = vst [vmem:[#allocation5 + $0xb0] sm:$0xff] %v1656
    %1671 = vst [vmem:[#allocation5 + $0xd8] sm:$0xff] %v1657
    %v1672 = vld [vmem:[#allocation5 + $0x100] sm:$0x11]
    %v1673 = vsel %vm695, %v1658, %v1672
    %1674 = vst [vmem:[#allocation5 + $0x100] sm:$0x11] %v1673
    %v1675 = vld [vmem:[#allocation2 + $0x18] sm:$0xff]
    %v1676 = vld [vmem:[#allocation2 + $0x40] sm:$0xff]
    %v1677 = vld [vmem:[#allocation2 + $0x68] sm:$0xff]
    %v1678 = vld [vmem:[#allocation2 + $0x90] sm:$0xff]
    %v1679 = vld [vmem:[#allocation2 + $0xb8] sm:$0xff]
    %v1680 = vld [vmem:[#allocation2 + $0xe0] sm:$0xff]
    %v1681 = vld [vmem:[#allocation2 + $0x108] sm:$0xff]
    %v1682 = vld [vmem:[#allocation2 + $0x130] sm:$0xff]
    %v1683 = vld [vmem:[#allocation2 + $0x158] sm:$0xff]
    %v1684 = vld [vmem:[#allocation2 + $0x180] sm:$0xff]
    %v1685 = vld [vmem:[#allocation2 + $0x1a8] sm:$0xff]
    %v1686 = vld [vmem:[#allocation2 + $0x1d0] sm:$0xff]
    %v1687 = vld [vmem:[#allocation2 + $0x1f8] sm:$0xff]
    %v1688 = vld [vmem:[#allocation2 + $0x220] sm:$0xff]
    %v1689 = vld [vmem:[#allocation2 + $0x248] sm:$0xff]
    %v1690 = vld [vmem:[#allocation2 + $0x270] sm:$0xff]
    %v1691 = vld [vmem:[#allocation2 + $0x298] sm:$0xff]
    %v1692 = vld [vmem:[#allocation2 + $0x2c0] sm:$0xff]
    %v1693 = vld [vmem:[#allocation2 + $0x2e8] sm:$0xff]
    %v1694 = vld [vmem:[#allocation2 + $0x310] sm:$0xff]
    %v1695 = vld [vmem:[#allocation2 + $0x338] sm:$0xff]
    %v1696 = vld [vmem:[#allocation2 + $0x360] sm:$0xff]
    %v1697 = vld [vmem:[#allocation2 + $0x388] sm:$0xff]
    %v1698 = vld [vmem:[#allocation2 + $0x3b0] sm:$0xff]
    %v1699 = vld [vmem:[#allocation2 + $0x3d8] sm:$0xff]
    %v1700 = vld [vmem:[#allocation2 + $0x400] sm:$0xff]
    %v1701 = vld [vmem:[#allocation2 + $0x428] sm:$0xff]
    %v1702 = vld [vmem:[#allocation2 + $0x450] sm:$0xff]
    %v1703 = vld [vmem:[#allocation2 + $0x478] sm:$0xff]
    %v1704 = vld [vmem:[#allocation2 + $0x4a0] sm:$0xff]
    %v1705 = vld [vmem:[#allocation2 + $0x4c8] sm:$0xff]
    %v1706 = vld [vmem:[#allocation2 + $0x4f0] sm:$0xff]
    %v1739 = vunpack.c.l.b16 %v1675
    %v1740 = vunpack.c.h.b16 %v1675
    %v1741 = vunpack.c.l.b16 %v1676
    %v1742 = vunpack.c.h.b16 %v1676
    %v1743 = vunpack.c.l.b16 %v1677
    %v1744 = vunpack.c.h.b16 %v1677
    %v1745 = vunpack.c.l.b16 %v1678
    %v1746 = vunpack.c.h.b16 %v1678
    %v1747 = vunpack.c.l.b16 %v1679
    %v1748 = vunpack.c.h.b16 %v1679
    %v1749 = vunpack.c.l.b16 %v1680
    %v1750 = vunpack.c.h.b16 %v1680
    %v1751 = vunpack.c.l.b16 %v1681
    %v1752 = vunpack.c.h.b16 %v1681
    %v1753 = vunpack.c.l.b16 %v1682
    %v1754 = vunpack.c.h.b16 %v1682
    %v1755 = vunpack.c.l.b16 %v1683
    %v1756 = vunpack.c.h.b16 %v1683
    %v1757 = vunpack.c.l.b16 %v1684
    %v1758 = vunpack.c.h.b16 %v1684
    %v1759 = vunpack.c.l.b16 %v1685
    %v1760 = vunpack.c.h.b16 %v1685
    %v1761 = vunpack.c.l.b16 %v1686
    %v1762 = vunpack.c.h.b16 %v1686
    %v1763 = vunpack.c.l.b16 %v1687
    %v1764 = vunpack.c.h.b16 %v1687
    %v1765 = vunpack.c.l.b16 %v1688
    %v1766 = vunpack.c.h.b16 %v1688
    %v1767 = vunpack.c.l.b16 %v1689
    %v1768 = vunpack.c.h.b16 %v1689
    %v1769 = vunpack.c.l.b16 %v1690
    %v1770 = vunpack.c.h.b16 %v1690
    %v1771 = vunpack.c.l.b16 %v1691
    %v1772 = vunpack.c.h.b16 %v1691
    %v1773 = vunpack.c.l.b16 %v1692
    %v1774 = vunpack.c.h.b16 %v1692
    %v1775 = vunpack.c.l.b16 %v1693
    %v1776 = vunpack.c.h.b16 %v1693
    %v1777 = vunpack.c.l.b16 %v1694
    %v1778 = vunpack.c.h.b16 %v1694
    %v1779 = vunpack.c.l.b16 %v1695
    %v1780 = vunpack.c.h.b16 %v1695
    %v1781 = vunpack.c.l.b16 %v1696
    %v1782 = vunpack.c.h.b16 %v1696
    %v1783 = vunpack.c.l.b16 %v1697
    %v1784 = vunpack.c.h.b16 %v1697
    %v1785 = vunpack.c.l.b16 %v1698
    %v1786 = vunpack.c.h.b16 %v1698
    %v1787 = vunpack.c.l.b16 %v1699
    %v1788 = vunpack.c.h.b16 %v1699
    %v1789 = vunpack.c.l.b16 %v1700
    %v1790 = vunpack.c.h.b16 %v1700
    %v1791 = vunpack.c.l.b16 %v1701
    %v1792 = vunpack.c.h.b16 %v1701
    %v1793 = vunpack.c.l.b16 %v1702
    %v1794 = vunpack.c.h.b16 %v1702
    %v1795 = vunpack.c.l.b16 %v1703
    %v1796 = vunpack.c.h.b16 %v1703
    %v1797 = vunpack.c.l.b16 %v1704
    %v1798 = vunpack.c.h.b16 %v1704
    %v1799 = vunpack.c.l.b16 %v1705
    %v1800 = vunpack.c.h.b16 %v1705
    %v1801 = vunpack.c.l.b16 %v1706
    %v1802 = vunpack.c.h.b16 %v1706
    %v1803 = vpack.c.b16 %v1741, %v1739
    %v1804 = vpack.c.b16 %v1742, %v1740
    %v1805 = vpack.c.b16 %v1745, %v1743
    %v1806 = vpack.c.b16 %v1746, %v1744
    %v1807 = vpack.c.b16 %v1749, %v1747
    %v1808 = vpack.c.b16 %v1750, %v1748
    %v1809 = vpack.c.b16 %v1753, %v1751
    %v1810 = vpack.c.b16 %v1754, %v1752
    %v1811 = vpack.c.b16 %v1757, %v1755
    %v1812 = vpack.c.b16 %v1758, %v1756
    %v1813 = vpack.c.b16 %v1761, %v1759
    %v1814 = vpack.c.b16 %v1762, %v1760
    %v1815 = vpack.c.b16 %v1765, %v1763
    %v1816 = vpack.c.b16 %v1766, %v1764
    %v1817 = vpack.c.b16 %v1769, %v1767
    %v1818 = vpack.c.b16 %v1770, %v1768
    %v1819 = vpack.c.b16 %v1773, %v1771
    %v1820 = vpack.c.b16 %v1774, %v1772
    %v1821 = vpack.c.b16 %v1777, %v1775
    %v1822 = vpack.c.b16 %v1778, %v1776
    %v1823 = vpack.c.b16 %v1781, %v1779
    %v1824 = vpack.c.b16 %v1782, %v1780
    %v1825 = vpack.c.b16 %v1785, %v1783
    %v1826 = vpack.c.b16 %v1786, %v1784
    %v1827 = vpack.c.b16 %v1789, %v1787
    %v1828 = vpack.c.b16 %v1790, %v1788
    %v1829 = vpack.c.b16 %v1793, %v1791
    %v1830 = vpack.c.b16 %v1794, %v1792
    %v1831 = vpack.c.b16 %v1797, %v1795
    %v1832 = vpack.c.b16 %v1798, %v1796
    %v1833 = vpack.c.b16 %v1801, %v1799
    %v1834 = vpack.c.b16 %v1802, %v1800
    %1867 = vmatprep.subr.bf16.mxu0 %v1804
    %1868 = vmatpush1.bf16.msra.mxu0 %v1803
    %1869 = vmatprep.subr.bf16.mxu0 %v1806
    %1870 = vmatpush1.bf16.msra.mxu0 %v1805
    %1871 = vmatprep.subr.bf16.mxu0 %v1808
    %1872 = vmatpush1.bf16.msra.mxu0 %v1807
    %1873 = vmatprep.subr.bf16.mxu0 %v1810
    %1874 = vmatpush1.bf16.msra.mxu0 %v1809
    %1875 = vmatprep.subr.bf16.mxu0 %v1812
    %1876 = vmatpush1.bf16.msra.mxu0 %v1811
    %1877 = vmatprep.subr.bf16.mxu0 %v1814
    %1878 = vmatpush1.bf16.msra.mxu0 %v1813
    %1879 = vmatprep.subr.bf16.mxu0 %v1816
    %1880 = vmatpush1.bf16.msra.mxu0 %v1815
    %1881 = vmatprep.subr.bf16.mxu0 %v1818
    %1882 = vmatpush1.bf16.msra.mxu0 %v1817
    %1883 = vmatprep.subr.bf16.mxu0 %v1820
    %1884 = vmatpush1.bf16.msra.mxu0 %v1819
    %1885 = vmatprep.subr.bf16.mxu0 %v1822
    %1886 = vmatpush1.bf16.msra.mxu0 %v1821
    %1887 = vmatprep.subr.bf16.mxu0 %v1824
    %1888 = vmatpush1.bf16.msra.mxu0 %v1823
    %1889 = vmatprep.subr.bf16.mxu0 %v1826
    %1890 = vmatpush1.bf16.msra.mxu0 %v1825
    %1891 = vmatprep.subr.bf16.mxu0 %v1828
    %1892 = vmatpush1.bf16.msra.mxu0 %v1827
    %1893 = vmatprep.subr.bf16.mxu0 %v1830
    %1894 = vmatpush1.bf16.msra.mxu0 %v1829
    %1895 = vmatprep.subr.bf16.mxu0 %v1832
    %1896 = vmatpush1.bf16.msra.mxu0 %v1831
    %1897 = vmatprep.subr.bf16.mxu0 %v1834
    %1898 = vmatpush1.bf16.msra.mxu0 %v1833
    %1899 = vmatprep.mubr.bf16.mxu0 %v196
    %1900 = vmatmul.mubr.bf16.gmra.mrb[0].mxu0 %v195
    %v1901 = vpop.f32.mrb[0].mxu0
    %v1902 = vadd.f32 0.0, %v1901
    %v1903 = vpop.f32.mrb[0].mxu0
    %v1904 = vadd.f32 0.0, %v1903
    %v1905 = vpop.f32.mrb[0].mxu0
    %v1906 = vadd.f32 0.0, %v1905
    %v1907 = vpop.f32.mrb[0].mxu0
    %v1908 = vadd.f32 0.0, %v1907
    %1909 = vmatprep.mubr.bf16.mxu0 %v198
    %1910 = vmatmul.mubr.bf16.gmra.mrb[0].mxu0 %v197
    %v1911 = vpop.f32.mrb[0].mxu0
    %v1912 = vadd.f32 0.0, %v1911
    %v1913 = vpop.f32.mrb[0].mxu0
    %v1914 = vadd.f32 0.0, %v1913
    %v1915 = vpop.f32.mrb[0].mxu0
    %v1916 = vadd.f32 0.0, %v1915
    %v1917 = vpop.f32.mrb[0].mxu0
    %v1918 = vadd.f32 0.0, %v1917
    %1919 = vmatprep.mubr.bf16.mxu0 %v200
    %1920 = vmatmul.mubr.bf16.gmra.mrb[0].mxu0 %v199
    %v1921 = vpop.f32.mrb[0].mxu0
    %v1922 = vadd.f32 0.0, %v1921
    %v1923 = vpop.f32.mrb[0].mxu0
    %v1924 = vadd.f32 0.0, %v1923
    %v1925 = vpop.f32.mrb[0].mxu0
    %v1926 = vadd.f32 0.0, %v1925
    %v1927 = vpop.f32.mrb[0].mxu0
    %v1928 = vadd.f32 0.0, %v1927
    %1929 = vmatprep.mubr.bf16.mxu0 %v202
    %1930 = vmatmul.mubr.bf16.gmra.mrb[0].mxu0 %v201
    %v1931 = vpop.f32.mrb[0].mxu0
    %v1932 = vadd.f32 0.0, %v1931
    %v1933 = vpop.f32.mrb[0].mxu0
    %v1934 = vadd.f32 0.0, %v1933
    %v1935 = vpop.f32.mrb[0].mxu0
    %v1936 = vpop.f32.mrb[0].mxu0
    %1937 = vdwg.mxu0
    %v1938 = vadd.f32 %v1902, %v1906
    %v1939 = vadd.f32 %v1938, %v1912
    %v1940 = vadd.f32 %v1939, %v1916
    %v1941 = vadd.f32 %v1940, %v1922
    %v1942 = vadd.f32 %v1941, %v1926
    %v1943 = vsel %vm471, %v1932, 0.0
    %v1944 = vadd.f32 %v1942, %v1943
    %v1945 = vrot.slane %v1944, 4
    %v1946 = vadd.f32 %v1944, %v1945
    %v1947 = vrot.slane %v1946, 2
    %v1948 = vadd.f32 %v1946, %v1947
    %v1949 = vrot.slane %v1948, 1
    %v1950 = vadd.f32 %v1948, %v1949
    %v1951 = vadd.f32 %v1904, %v1908
    %v1952 = vadd.f32 %v1951, %v1914
    %v1953 = vadd.f32 %v1952, %v1918
    %v1954 = vadd.f32 %v1953, %v1924
    %v1955 = vadd.f32 %v1954, %v1928
    %v1956 = vsel %vm471, %v1934, 0.0
    %v1957 = vadd.f32 %v1955, %v1956
    %v1958 = vrot.slane %v1957, 4
    %v1959 = vadd.f32 %v1957, %v1958
    %v1960 = vrot.slane %v1959, 2
    %v1961 = vadd.f32 %v1959, %v1960
    %v1962 = vrot.slane %v1961, 1
    %v1963 = vadd.f32 %v1961, %v1962
    %v1964 = vmul.f32 %v1950, 0.020408163
    %v1965 = vmul.f32 %v1963, 0.020408163
    %v1966 = vmul.f32 %v1902, %v1902
    %v1967 = vmul.f32 %v1904, %v1904
    %v1968 = vmul.f32 %v1906, %v1906
    %v1969 = vmul.f32 %v1908, %v1908
    %v1970 = vmul.f32 %v1912, %v1912
    %v1971 = vmul.f32 %v1914, %v1914
    %v1972 = vmul.f32 %v1916, %v1916
    %v1973 = vmul.f32 %v1918, %v1918
    %v1974 = vmul.f32 %v1922, %v1922
    %v1975 = vmul.f32 %v1924, %v1924
    %v1976 = vmul.f32 %v1926, %v1926
    %v1977 = vmul.f32 %v1928, %v1928
    %v1978 = vmul.f32 %v1932, %v1932
    %v1979 = vmul.f32 %v1934, %v1934
    %v1980 = vadd.f32 %v1966, %v1968
    %v1981 = vadd.f32 %v1980, %v1970
    %v1982 = vadd.f32 %v1981, %v1972
    %v1983 = vadd.f32 %v1982, %v1974
    %v1984 = vadd.f32 %v1983, %v1976
    %v1985 = vsel %vm471, %v1978, 0.0
    %v1986 = vadd.f32 %v1984, %v1985
    %v1987 = vrot.slane %v1986, 4
    %v1988 = vadd.f32 %v1986, %v1987
    %v1989 = vrot.slane %v1988, 2
    %v1990 = vadd.f32 %v1988, %v1989
    %v1991 = vrot.slane %v1990, 1
    %v1992 = vadd.f32 %v1990, %v1991
    %v1993 = vadd.f32 %v1967, %v1969
    %v1994 = vadd.f32 %v1993, %v1971
    %v1995 = vadd.f32 %v1994, %v1973
    %v1996 = vadd.f32 %v1995, %v1975
    %v1997 = vadd.f32 %v1996, %v1977
    %v1998 = vsel %vm471, %v1979, 0.0
    %v1999 = vadd.f32 %v1997, %v1998
    %v2000 = vrot.slane %v1999, 4
    %v2001 = vadd.f32 %v1999, %v2000
    %v2002 = vrot.slane %v2001, 2
    %v2003 = vadd.f32 %v2001, %v2002
    %v2004 = vrot.slane %v2003, 1
    %v2005 = vadd.f32 %v2003, %v2004
    %v2006 = vmul.f32 %v1992, 0.020408163
    %v2007 = vmul.f32 %v2005, 0.020408163
    %v2008 = vmul.f32 %v1964, %v1964
    %v2009 = vmul.f32 %v1965, %v1965
    %v2010 = vsub.f32 %v2006, %v2008
    %v2011 = vsub.f32 %v2007, %v2009
    %v2012 = vmax.f32 %v2010, 0.0
    %v2013 = vmax.f32 %v2011, 0.0
    %v2014 = vld [vmem:[%s3 + $0x6] sm:$0x3]
    %v2015 = vadd.f32 %v2012, 0.001
    %v2016 = vadd.f32 %v2013, 0.001
    %v2017 = vrsqrt.pop %v2015
    %v2018 = vrsqrt.pop %v2016
    %v2021 = vcombine.low %v2017, %v2018
    %v2023 = vunpack.c.l.s4 1966171168
    %v2024 = vunpack.c.0.s8 %v2023
    %v2025 = vlaneseq
    %v2026 = vshrl.u32 %v2025, 7
    %v2027 = vsub.s32 %v2024, %v2026
    %v2028 = vrot.slane %v2021, %v2027
    %v2030 = vunpack.c.l.s4 1966171168
    %v2031 = vunpack.c.0.s8 %v2030
    %v2032 = vlaneseq
    %v2033 = vshrl.u32 %v2032, 7
    %v2034 = vsub.s32 %v2031, %v2033
    %v2035 = vrot.slane %v2028, %v2034
    %v2037 = vmul.f32 %v2014, %v2035
    %v2038 = vld [vmem:[%s4 + $0x6] sm:$0x3]
    %v2040 = vlaneseq
    %v2041 = vshrl.u32 %v2040, 7
    %v2042 = vsub.s32 0, %v2041
    %v2043 = vrot.slane %v2037, %v2042
    %v2044 = vlaneseq
    %v2045 = vshrl.u32 %v2044, 7
    %v2046 = vsub.s32 1, %v2045
    %v2047 = vrot.slane %v2037, %v2046
    %v2050 = vmul.f32 %v1964, %v2043
    %v2051 = vmul.f32 %v1965, %v2047
    %v2054 = vcombine.low %v2050, %v2051
    %v2056 = vunpack.c.l.s4 1966171168
    %v2057 = vunpack.c.0.s8 %v2056
    %v2058 = vlaneseq
    %v2059 = vshrl.u32 %v2058, 7
    %v2060 = vsub.s32 %v2057, %v2059
    %v2061 = vrot.slane %v2054, %v2060
    %v2063 = vunpack.c.l.s4 1966171168
    %v2064 = vunpack.c.0.s8 %v2063
    %v2065 = vlaneseq
    %v2066 = vshrl.u32 %v2065, 7
    %v2067 = vsub.s32 %v2064, %v2066
    %v2068 = vrot.slane %v2061, %v2067
    %v2070 = vsub.f32 %v2038, %v2068
    %v2071 = vmul.f32 %v1902, %v2043
    %v2072 = vmul.f32 %v1904, %v2047
    %v2073 = vmul.f32 %v1906, %v2043
    %v2074 = vmul.f32 %v1908, %v2047
    %v2075 = vmul.f32 %v1912, %v2043
    %v2076 = vmul.f32 %v1914, %v2047
    %v2077 = vmul.f32 %v1916, %v2043
    %v2078 = vmul.f32 %v1918, %v2047
    %v2079 = vmul.f32 %v1922, %v2043
    %v2080 = vmul.f32 %v1924, %v2047
    %v2081 = vmul.f32 %v1926, %v2043
    %v2082 = vmul.f32 %v1928, %v2047
    %v2083 = vmul.f32 %v1932, %v2043
    %v2084 = vmul.f32 %v1934, %v2047
    %v2086 = vlaneseq
    %v2087 = vshrl.u32 %v2086, 7
    %v2088 = vsub.s32 0, %v2087
    %v2089 = vrot.slane %v2070, %v2088
    %v2090 = vlaneseq
    %v2091 = vshrl.u32 %v2090, 7
    %v2092 = vsub.s32 1, %v2091
    %v2093 = vrot.slane %v2070, %v2092
    %v2096 = vadd.f32 %v2071, %v2089
    %v2097 = vadd.f32 %v2072, %v2093
    %v2098 = vadd.f32 %v2073, %v2089
    %v2099 = vadd.f32 %v2074, %v2093
    %v2100 = vadd.f32 %v2075, %v2089
    %v2101 = vadd.f32 %v2076, %v2093
    %v2102 = vadd.f32 %v2077, %v2089
    %v2103 = vadd.f32 %v2078, %v2093
    %v2104 = vadd.f32 %v2079, %v2089
    %v2105 = vadd.f32 %v2080, %v2093
    %v2106 = vadd.f32 %v2081, %v2089
    %v2107 = vadd.f32 %v2082, %v2093
    %v2108 = vadd.f32 %v2083, %v2089
    %v2109 = vadd.f32 %v2084, %v2093
    %v2110 = vpack.c.bf16 %v2098, %v2096
    %v2111 = vpack.c.bf16 %v2099, %v2097
    %v2112 = vpack.c.bf16 %v2102, %v2100
    %v2113 = vpack.c.bf16 %v2103, %v2101
    %v2114 = vpack.c.bf16 %v2106, %v2104
    %v2115 = vpack.c.bf16 %v2107, %v2105
    %v2116 = vpack.c.bf16 %v2108, %v2108
    %v2117 = vpack.c.bf16 %v2109, %v2109
    %v2126 = vunpack.c.l.b16 %v2110
    %v2127 = vunpack.c.l.b16 %v2111
    %v2128 = vunpack.c.h.b16 %v2110
    %v2129 = vunpack.c.h.b16 %v2111
    %v2130 = vunpack.c.l.b16 %v2112
    %v2131 = vunpack.c.l.b16 %v2113
    %v2132 = vunpack.c.h.b16 %v2112
    %v2133 = vunpack.c.h.b16 %v2113
    %v2134 = vunpack.c.l.b16 %v2114
    %v2135 = vunpack.c.l.b16 %v2115
    %v2136 = vunpack.c.h.b16 %v2114
    %v2137 = vunpack.c.h.b16 %v2115
    %v2138 = vunpack.c.l.b16 %v2116
    %v2139 = vunpack.c.l.b16 %v2117
    %v2140 = vpack.c.b16 %v2127, %v2126
    %v2141 = vpack.c.b16 %v2129, %v2128
    %v2142 = vpack.c.b16 %v2131, %v2130
    %v2143 = vpack.c.b16 %v2133, %v2132
    %v2144 = vpack.c.b16 %v2135, %v2134
    %v2145 = vpack.c.b16 %v2137, %v2136
    %v2146 = vpack.c.b16 %v2139, %v2138
    %2154 = vst [vmem:[#allocation5 + $0x18] sm:$0xff] %v2140
    %2155 = vst [vmem:[#allocation5 + $0x40] sm:$0xff] %v2141
    %2156 = vst [vmem:[#allocation5 + $0x68] sm:$0xff] %v2142
    %2157 = vst [vmem:[#allocation5 + $0x90] sm:$0xff] %v2143
    %2158 = vst [vmem:[#allocation5 + $0xb8] sm:$0xff] %v2144
    %2159 = vst [vmem:[#allocation5 + $0xe0] sm:$0xff] %v2145
    %v2160 = vld [vmem:[#allocation5 + $0x108] sm:$0x11]
    %v2161 = vsel %vm695, %v2146, %v2160
    %2162 = vst [vmem:[#allocation5 + $0x108] sm:$0x11] %v2161
    %v2163 = vld [vmem:[#allocation2 + $0x20] sm:$0xff]
    %v2164 = vld [vmem:[#allocation2 + $0x48] sm:$0xff]
    %v2165 = vld [vmem:[#allocation2 + $0x70] sm:$0xff]
    %v2166 = vld [vmem:[#allocation2 + $0x98] sm:$0xff]
    %v2167 = vld [vmem:[#allocation2 + $0xc0] sm:$0xff]
    %v2168 = vld [vmem:[#allocation2 + $0xe8] sm:$0xff]
    %v2169 = vld [vmem:[#allocation2 + $0x110] sm:$0xff]
    %v2170 = vld [vmem:[#allocation2 + $0x138] sm:$0xff]
    %v2171 = vld [vmem:[#allocation2 + $0x160] sm:$0xff]
    %v2172 = vld [vmem:[#allocation2 + $0x188] sm:$0xff]
    %v2173 = vld [vmem:[#allocation2 + $0x1b0] sm:$0xff]
    %v2174 = vld [vmem:[#allocation2 + $0x1d8] sm:$0xff]
    %v2175 = vld [vmem:[#allocation2 + $0x200] sm:$0xff]
    %v2176 = vld [vmem:[#allocation2 + $0x228] sm:$0xff]
    %v2177 = vld [vmem:[#allocation2 + $0x250] sm:$0xff]
    %v2178 = vld [vmem:[#allocation2 + $0x278] sm:$0xff]
    %v2179 = vld [vmem:[#allocation2 + $0x2a0] sm:$0xff]
    %v2180 = vld [vmem:[#allocation2 + $0x2c8] sm:$0xff]
    %v2181 = vld [vmem:[#allocation2 + $0x2f0] sm:$0xff]
    %v2182 = vld [vmem:[#allocation2 + $0x318] sm:$0xff]
    %v2183 = vld [vmem:[#allocation2 + $0x340] sm:$0xff]
    %v2184 = vld [vmem:[#allocation2 + $0x368] sm:$0xff]
    %v2185 = vld [vmem:[#allocation2 + $0x390] sm:$0xff]
    %v2186 = vld [vmem:[#allocation2 + $0x3b8] sm:$0xff]
    %v2187 = vld [vmem:[#allocation2 + $0x3e0] sm:$0xff]
    %v2188 = vld [vmem:[#allocation2 + $0x408] sm:$0xff]
    %v2189 = vld [vmem:[#allocation2 + $0x430] sm:$0xff]
    %v2190 = vld [vmem:[#allocation2 + $0x458] sm:$0xff]
    %v2191 = vld [vmem:[#allocation2 + $0x480] sm:$0xff]
    %v2192 = vld [vmem:[#allocation2 + $0x4a8] sm:$0xff]
    %v2193 = vld [vmem:[#allocation2 + $0x4d0] sm:$0xff]
    %v2194 = vld [vmem:[#allocation2 + $0x4f8] sm:$0xff]
    %v2227 = vunpack.c.l.b16 %v2163
    %v2228 = vunpack.c.h.b16 %v2163
    %v2229 = vunpack.c.l.b16 %v2164
    %v2230 = vunpack.c.h.b16 %v2164
    %v2231 = vunpack.c.l.b16 %v2165
    %v2232 = vunpack.c.h.b16 %v2165
    %v2233 = vunpack.c.l.b16 %v2166
    %v2234 = vunpack.c.h.b16 %v2166
    %v2235 = vunpack.c.l.b16 %v2167
    %v2236 = vunpack.c.h.b16 %v2167
    %v2237 = vunpack.c.l.b16 %v2168
    %v2238 = vunpack.c.h.b16 %v2168
    %v2239 = vunpack.c.l.b16 %v2169
    %v2240 = vunpack.c.h.b16 %v2169
    %v2241 = vunpack.c.l.b16 %v2170
    %v2242 = vunpack.c.h.b16 %v2170
    %v2243 = vunpack.c.l.b16 %v2171
    %v2244 = vunpack.c.h.b16 %v2171
    %v2245 = vunpack.c.l.b16 %v2172
    %v2246 = vunpack.c.h.b16 %v2172
    %v2247 = vunpack.c.l.b16 %v2173
    %v2248 = vunpack.c.h.b16 %v2173
    %v2249 = vunpack.c.l.b16 %v2174
    %v2250 = vunpack.c.h.b16 %v2174
    %v2251 = vunpack.c.l.b16 %v2175
    %v2252 = vunpack.c.h.b16 %v2175
    %v2253 = vunpack.c.l.b16 %v2176
    %v2254 = vunpack.c.h.b16 %v2176
    %v2255 = vunpack.c.l.b16 %v2177
    %v2256 = vunpack.c.h.b16 %v2177
    %v2257 = vunpack.c.l.b16 %v2178
    %v2258 = vunpack.c.h.b16 %v2178
    %v2259 = vunpack.c.l.b16 %v2179
    %v2260 = vunpack.c.h.b16 %v2179
    %v2261 = vunpack.c.l.b16 %v2180
    %v2262 = vunpack.c.h.b16 %v2180
    %v2263 = vunpack.c.l.b16 %v2181
    %v2264 = vunpack.c.h.b16 %v2181
    %v2265 = vunpack.c.l.b16 %v2182
    %v2266 = vunpack.c.h.b16 %v2182
    %v2267 = vunpack.c.l.b16 %v2183
    %v2268 = vunpack.c.h.b16 %v2183
    %v2269 = vunpack.c.l.b16 %v2184
    %v2270 = vunpack.c.h.b16 %v2184
    %v2271 = vunpack.c.l.b16 %v2185
    %v2272 = vunpack.c.h.b16 %v2185
    %v2273 = vunpack.c.l.b16 %v2186
    %v2274 = vunpack.c.h.b16 %v2186
    %v2275 = vunpack.c.l.b16 %v2187
    %v2276 = vunpack.c.h.b16 %v2187
    %v2277 = vunpack.c.l.b16 %v2188
    %v2278 = vunpack.c.h.b16 %v2188
    %v2279 = vunpack.c.l.b16 %v2189
    %v2280 = vunpack.c.h.b16 %v2189
    %v2281 = vunpack.c.l.b16 %v2190
    %v2282 = vunpack.c.h.b16 %v2190
    %v2283 = vunpack.c.l.b16 %v2191
    %v2284 = vunpack.c.h.b16 %v2191
    %v2285 = vunpack.c.l.b16 %v2192
    %v2286 = vunpack.c.h.b16 %v2192
    %v2287 = vunpack.c.l.b16 %v2193
    %v2288 = vunpack.c.h.b16 %v2193
    %v2289 = vunpack.c.l.b16 %v2194
    %v2290 = vunpack.c.h.b16 %v2194
    %v2291 = vpack.c.b16 %v2229, %v2227
    %v2292 = vpack.c.b16 %v2230, %v2228
    %v2293 = vpack.c.b16 %v2233, %v2231
    %v2294 = vpack.c.b16 %v2234, %v2232
    %v2295 = vpack.c.b16 %v2237, %v2235
    %v2296 = vpack.c.b16 %v2238, %v2236
    %v2297 = vpack.c.b16 %v2241, %v2239
    %v2298 = vpack.c.b16 %v2242, %v2240
    %v2299 = vpack.c.b16 %v2245, %v2243
    %v2300 = vpack.c.b16 %v2246, %v2244
    %v2301 = vpack.c.b16 %v2249, %v2247
    %v2302 = vpack.c.b16 %v2250, %v2248
    %v2303 = vpack.c.b16 %v2253, %v2251
    %v2304 = vpack.c.b16 %v2254, %v2252
    %v2305 = vpack.c.b16 %v2257, %v2255
    %v2306 = vpack.c.b16 %v2258, %v2256
    %v2307 = vpack.c.b16 %v2261, %v2259
    %v2308 = vpack.c.b16 %v2262, %v2260
    %v2309 = vpack.c.b16 %v2265, %v2263
    %v2310 = vpack.c.b16 %v2266, %v2264
    %v2311 = vpack.c.b16 %v2269, %v2267
    %v2312 = vpack.c.b16 %v2270, %v2268
    %v2313 = vpack.c.b16 %v2273, %v2271
    %v2314 = vpack.c.b16 %v2274, %v2272
    %v2315 = vpack.c.b16 %v2277, %v2275
    %v2316 = vpack.c.b16 %v2278, %v2276
    %v2317 = vpack.c.b16 %v2281, %v2279
    %v2318 = vpack.c.b16 %v2282, %v2280
    %v2319 = vpack.c.b16 %v2285, %v2283
    %v2320 = vpack.c.b16 %v2286, %v2284
    %v2321 = vpack.c.b16 %v2289, %v2287
    %v2322 = vpack.c.b16 %v2290, %v2288
    %2355 = vmatprep.subr.bf16.mxu0 %v2292
    %2356 = vmatpush1.bf16.msra.mxu0 %v2291
    %2357 = vmatprep.subr.bf16.mxu0 %v2294
    %2358 = vmatpush1.bf16.msra.mxu0 %v2293
    %2359 = vmatprep.subr.bf16.mxu0 %v2296
    %2360 = vmatpush1.bf16.msra.mxu0 %v2295
    %2361 = vmatprep.subr.bf16.mxu0 %v2298
    %2362 = vmatpush1.bf16.msra.mxu0 %v2297
    %2363 = vmatprep.subr.bf16.mxu0 %v2300
    %2364 = vmatpush1.bf16.msra.mxu0 %v2299
    %2365 = vmatprep.subr.bf16.mxu0 %v2302
    %2366 = vmatpush1.bf16.msra.mxu0 %v2301
    %2367 = vmatprep.subr.bf16.mxu0 %v2304
    %2368 = vmatpush1.bf16.msra.mxu0 %v2303
    %2369 = vmatprep.subr.bf16.mxu0 %v2306
    %2370 = vmatpush1.bf16.msra.mxu0 %v2305
    %2371 = vmatprep.subr.bf16.mxu0 %v2308
    %2372 = vmatpush1.bf16.msra.mxu0 %v2307
    %2373 = vmatprep.subr.bf16.mxu0 %v2310
    %2374 = vmatpush1.bf16.msra.mxu0 %v2309
    %2375 = vmatprep.subr.bf16.mxu0 %v2312
    %2376 = vmatpush1.bf16.msra.mxu0 %v2311
    %2377 = vmatprep.subr.bf16.mxu0 %v2314
    %2378 = vmatpush1.bf16.msra.mxu0 %v2313
    %2379 = vmatprep.subr.bf16.mxu0 %v2316
    %2380 = vmatpush1.bf16.msra.mxu0 %v2315
    %2381 = vmatprep.subr.bf16.mxu0 %v2318
    %2382 = vmatpush1.bf16.msra.mxu0 %v2317
    %2383 = vmatprep.subr.bf16.mxu0 %v2320
    %2384 = vmatpush1.bf16.msra.mxu0 %v2319
    %2385 = vmatprep.subr.bf16.mxu0 %v2322
    %2386 = vmatpush1.bf16.msra.mxu0 %v2321
    %2387 = vmatprep.mubr.bf16.mxu0 %v196
    %2388 = vmatmul.mubr.bf16.gmra.mrb[0].mxu0 %v195
    %v2389 = vpop.f32.mrb[0].mxu0
    %v2390 = vadd.f32 0.0, %v2389
    %v2391 = vpop.f32.mrb[0].mxu0
    %v2392 = vadd.f32 0.0, %v2391
    %v2393 = vpop.f32.mrb[0].mxu0
    %v2394 = vadd.f32 0.0, %v2393
    %v2395 = vpop.f32.mrb[0].mxu0
    %v2396 = vadd.f32 0.0, %v2395
    %2397 = vmatprep.mubr.bf16.mxu0 %v198
    %2398 = vmatmul.mubr.bf16.gmra.mrb[0].mxu0 %v197
    %v2399 = vpop.f32.mrb[0].mxu0
    %v2400 = vadd.f32 0.0, %v2399
    %v2401 = vpop.f32.mrb[0].mxu0
    %v2402 = vadd.f32 0.0, %v2401
    %v2403 = vpop.f32.mrb[0].mxu0
    %v2404 = vadd.f32 0.0, %v2403
    %v2405 = vpop.f32.mrb[0].mxu0
    %v2406 = vadd.f32 0.0, %v2405
    %2407 = vmatprep.mubr.bf16.mxu0 %v200
    %2408 = vmatmul.mubr.bf16.gmra.mrb[0].mxu0 %v199
    %v2409 = vpop.f32.mrb[0].mxu0
    %v2410 = vadd.f32 0.0, %v2409
    %v2411 = vpop.f32.mrb[0].mxu0
    %v2412 = vadd.f32 0.0, %v2411
    %v2413 = vpop.f32.mrb[0].mxu0
    %v2414 = vadd.f32 0.0, %v2413
    %v2415 = vpop.f32.mrb[0].mxu0
    %v2416 = vadd.f32 0.0, %v2415
    %2417 = vmatprep.mubr.bf16.mxu0 %v202
    %2418 = vmatmul.mubr.bf16.gmra.mrb[0].mxu0 %v201
    %v2419 = vpop.f32.mrb[0].mxu0
    %v2420 = vadd.f32 0.0, %v2419
    %v2421 = vpop.f32.mrb[0].mxu0
    %v2422 = vadd.f32 0.0, %v2421
    %v2423 = vpop.f32.mrb[0].mxu0
    %v2424 = vpop.f32.mrb[0].mxu0
    %2425 = vdwg.mxu0
    %v2426 = vadd.f32 %v2390, %v2394
    %v2427 = vadd.f32 %v2426, %v2400
    %v2428 = vadd.f32 %v2427, %v2404
    %v2429 = vadd.f32 %v2428, %v2410
    %v2430 = vadd.f32 %v2429, %v2414
    %v2431 = vsel %vm471, %v2420, 0.0
    %v2432 = vadd.f32 %v2430, %v2431
    %v2433 = vrot.slane %v2432, 4
    %v2434 = vadd.f32 %v2432, %v2433
    %v2435 = vrot.slane %v2434, 2
    %v2436 = vadd.f32 %v2434, %v2435
    %v2437 = vrot.slane %v2436, 1
    %v2438 = vadd.f32 %v2436, %v2437
    %v2439 = vadd.f32 %v2392, %v2396
    %v2440 = vadd.f32 %v2439, %v2402
    %v2441 = vadd.f32 %v2440, %v2406
    %v2442 = vadd.f32 %v2441, %v2412
    %v2443 = vadd.f32 %v2442, %v2416
    %v2444 = vsel %vm471, %v2422, 0.0
    %v2445 = vadd.f32 %v2443, %v2444
    %v2446 = vrot.slane %v2445, 4
    %v2447 = vadd.f32 %v2445, %v2446
    %v2448 = vrot.slane %v2447, 2
    %v2449 = vadd.f32 %v2447, %v2448
    %v2450 = vrot.slane %v2449, 1
    %v2451 = vadd.f32 %v2449, %v2450
    %v2452 = vmul.f32 %v2438, 0.020408163
    %v2453 = vmul.f32 %v2451, 0.020408163
    %v2454 = vmul.f32 %v2390, %v2390
    %v2455 = vmul.f32 %v2392, %v2392
    %v2456 = vmul.f32 %v2394, %v2394
    %v2457 = vmul.f32 %v2396, %v2396
    %v2458 = vmul.f32 %v2400, %v2400
    %v2459 = vmul.f32 %v2402, %v2402
    %v2460 = vmul.f32 %v2404, %v2404
    %v2461 = vmul.f32 %v2406, %v2406
    %v2462 = vmul.f32 %v2410, %v2410
    %v2463 = vmul.f32 %v2412, %v2412
    %v2464 = vmul.f32 %v2414, %v2414
    %v2465 = vmul.f32 %v2416, %v2416
    %v2466 = vmul.f32 %v2420, %v2420
    %v2467 = vmul.f32 %v2422, %v2422
    %v2468 = vadd.f32 %v2454, %v2456
    %v2469 = vadd.f32 %v2468, %v2458
    %v2470 = vadd.f32 %v2469, %v2460
    %v2471 = vadd.f32 %v2470, %v2462
    %v2472 = vadd.f32 %v2471, %v2464
    %v2473 = vsel %vm471, %v2466, 0.0
    %v2474 = vadd.f32 %v2472, %v2473
    %v2475 = vrot.slane %v2474, 4
    %v2476 = vadd.f32 %v2474, %v2475
    %v2477 = vrot.slane %v2476, 2
    %v2478 = vadd.f32 %v2476, %v2477
    %v2479 = vrot.slane %v2478, 1
    %v2480 = vadd.f32 %v2478, %v2479
    %v2481 = vadd.f32 %v2455, %v2457
    %v2482 = vadd.f32 %v2481, %v2459
    %v2483 = vadd.f32 %v2482, %v2461
    %v2484 = vadd.f32 %v2483, %v2463
    %v2485 = vadd.f32 %v2484, %v2465
    %v2486 = vsel %vm471, %v2467, 0.0
    %v2487 = vadd.f32 %v2485, %v2486
    %v2488 = vrot.slane %v2487, 4
    %v2489 = vadd.f32 %v2487, %v2488
    %v2490 = vrot.slane %v2489, 2
    %v2491 = vadd.f32 %v2489, %v2490
    %v2492 = vrot.slane %v2491, 1
    %v2493 = vadd.f32 %v2491, %v2492
    %v2494 = vmul.f32 %v2480, 0.020408163
    %v2495 = vmul.f32 %v2493, 0.020408163
    %v2496 = vmul.f32 %v2452, %v2452
    %v2497 = vmul.f32 %v2453, %v2453
    %v2498 = vsub.f32 %v2494, %v2496
    %v2499 = vsub.f32 %v2495, %v2497
    %v2500 = vmax.f32 %v2498, 0.0
    %v2501 = vmax.f32 %v2499, 0.0
    %v2502 = vld [vmem:[%s3 + $0x8] sm:$0x3]
    %v2503 = vadd.f32 %v2500, 0.001
    %v2504 = vadd.f32 %v2501, 0.001
    %v2505 = vrsqrt.pop %v2503
    %v2506 = vrsqrt.pop %v2504
    %v2509 = vcombine.low %v2505, %v2506
    %v2511 = vunpack.c.l.s4 1966171168
    %v2512 = vunpack.c.0.s8 %v2511
    %v2513 = vlaneseq
    %v2514 = vshrl.u32 %v2513, 7
    %v2515 = vsub.s32 %v2512, %v2514
    %v2516 = vrot.slane %v2509, %v2515
    %v2518 = vunpack.c.l.s4 1966171168
    %v2519 = vunpack.c.0.s8 %v2518
    %v2520 = vlaneseq
    %v2521 = vshrl.u32 %v2520, 7
    %v2522 = vsub.s32 %v2519, %v2521
    %v2523 = vrot.slane %v2516, %v2522
    %v2525 = vmul.f32 %v2502, %v2523
    %v2526 = vld [vmem:[%s4 + $0x8] sm:$0x3]
    %v2528 = vlaneseq
    %v2529 = vshrl.u32 %v2528, 7
    %v2530 = vsub.s32 0, %v2529
    %v2531 = vrot.slane %v2525, %v2530
    %v2532 = vlaneseq
    %v2533 = vshrl.u32 %v2532, 7
    %v2534 = vsub.s32 1, %v2533
    %v2535 = vrot.slane %v2525, %v2534
    %v2538 = vmul.f32 %v2452, %v2531
    %v2539 = vmul.f32 %v2453, %v2535
    %v2542 = vcombine.low %v2538, %v2539
    %v2544 = vunpack.c.l.s4 1966171168
    %v2545 = vunpack.c.0.s8 %v2544
    %v2546 = vlaneseq
    %v2547 = vshrl.u32 %v2546, 7
    %v2548 = vsub.s32 %v2545, %v2547
    %v2549 = vrot.slane %v2542, %v2548
    %v2551 = vunpack.c.l.s4 1966171168
    %v2552 = vunpack.c.0.s8 %v2551
    %v2553 = vlaneseq
    %v2554 = vshrl.u32 %v2553, 7
    %v2555 = vsub.s32 %v2552, %v2554
    %v2556 = vrot.slane %v2549, %v2555
    %v2558 = vsub.f32 %v2526, %v2556
    %v2559 = vmul.f32 %v2390, %v2531
    %v2560 = vmul.f32 %v2392, %v2535
    %v2561 = vmul.f32 %v2394, %v2531
    %v2562 = vmul.f32 %v2396, %v2535
    %v2563 = vmul.f32 %v2400, %v2531
    %v2564 = vmul.f32 %v2402, %v2535
    %v2565 = vmul.f32 %v2404, %v2531
    %v2566 = vmul.f32 %v2406, %v2535
    %v2567 = vmul.f32 %v2410, %v2531
    %v2568 = vmul.f32 %v2412, %v2535
    %v2569 = vmul.f32 %v2414, %v2531
    %v2570 = vmul.f32 %v2416, %v2535
    %v2571 = vmul.f32 %v2420, %v2531
    %v2572 = vmul.f32 %v2422, %v2535
    %v2574 = vlaneseq
    %v2575 = vshrl.u32 %v2574, 7
    %v2576 = vsub.s32 0, %v2575
    %v2577 = vrot.slane %v2558, %v2576
    %v2578 = vlaneseq
    %v2579 = vshrl.u32 %v2578, 7
    %v2580 = vsub.s32 1, %v2579
    %v2581 = vrot.slane %v2558, %v2580
    %v2584 = vadd.f32 %v2559, %v2577
    %v2585 = vadd.f32 %v2560, %v2581
    %v2586 = vadd.f32 %v2561, %v2577
    %v2587 = vadd.f32 %v2562, %v2581
    %v2588 = vadd.f32 %v2563, %v2577
    %v2589 = vadd.f32 %v2564, %v2581
    %v2590 = vadd.f32 %v2565, %v2577
    %v2591 = vadd.f32 %v2566, %v2581
    %v2592 = vadd.f32 %v2567, %v2577
    %v2593 = vadd.f32 %v2568, %v2581
    %v2594 = vadd.f32 %v2569, %v2577
    %v2595 = vadd.f32 %v2570, %v2581
    %v2596 = vadd.f32 %v2571, %v2577
    %v2597 = vadd.f32 %v2572, %v2581
    %v2598 = vpack.c.bf16 %v2586, %v2584
    %v2599 = vpack.c.bf16 %v2587, %v2585
    %v2600 = vpack.c.bf16 %v2590, %v2588
    %v2601 = vpack.c.bf16 %v2591, %v2589
    %v2602 = vpack.c.bf16 %v2594, %v2592
    %v2603 = vpack.c.bf16 %v2595, %v2593
    %v2604 = vpack.c.bf16 %v2596, %v2596
    %v2605 = vpack.c.bf16 %v2597, %v2597
    %v2614 = vunpack.c.l.b16 %v2598
    %v2615 = vunpack.c.l.b16 %v2599
    %v2616 = vunpack.c.h.b16 %v2598
    %v2617 = vunpack.c.h.b16 %v2599
    %v2618 = vunpack.c.l.b16 %v2600
    %v2619 = vunpack.c.l.b16 %v2601
    %v2620 = vunpack.c.h.b16 %v2600
    %v2621 = vunpack.c.h.b16 %v2601
    %v2622 = vunpack.c.l.b16 %v2602
    %v2623 = vunpack.c.l.b16 %v2603
    %v2624 = vunpack.c.h.b16 %v2602
    %v2625 = vunpack.c.h.b16 %v2603
    %v2626 = vunpack.c.l.b16 %v2604
    %v2627 = vunpack.c.l.b16 %v2605
    %v2628 = vpack.c.b16 %v2615, %v2614
    %v2629 = vpack.c.b16 %v2617, %v2616
    %v2630 = vpack.c.b16 %v2619, %v2618
    %v2631 = vpack.c.b16 %v2621, %v2620
    %v2632 = vpack.c.b16 %v2623, %v2622
    %v2633 = vpack.c.b16 %v2625, %v2624
    %v2634 = vpack.c.b16 %v2627, %v2626
    %2642 = vst [vmem:[#allocation5 + $0x20] sm:$0xff] %v2628
    %2643 = vst [vmem:[#allocation5 + $0x48] sm:$0xff] %v2629
    %2644 = vst [vmem:[#allocation5 + $0x70] sm:$0xff] %v2630
    %2645 = vst [vmem:[#allocation5 + $0x98] sm:$0xff] %v2631
    %2646 = vst [vmem:[#allocation5 + $0xc0] sm:$0xff] %v2632
    %2647 = vst [vmem:[#allocation5 + $0xe8] sm:$0xff] %v2633
    %v2648 = vld [vmem:[#allocation5 + $0x110] sm:$0x11]
    %v2649 = vsel %vm695, %v2634, %v2648
    %2650 = vst [vmem:[#allocation5 + $0x110] sm:$0x11] %v2649
    // Predicated region
    $region26: #{tpu_custom_call.1} parent=1 // pred_check
      _
    $region27: #{tpu_custom_call.1} parent=1 // pred_check_branch
      %2652 = sbr.rel (0) target = $region29
    $region28: #{tpu_custom_call.1} parent=1 // pred_region
      %s2654 = ssub.s32 4480, 4480
      %2655 = vsyncadd [#allocation4], %s2654
      %s2656 = sshll.u32 [#allocation5], 4
      %s2657 = int_to_ptr.vmem [resolvable:$true] %s2656
      %2662 = dma.vmem_to_hbm [thread:$0]  %s2657, 4480, %s5, [#allocation4], 640, 640, 40
    $region29: #{tpu_custom_call.1} parent=1 // pred_fallthru
      _
    // Predicated region
    $region30: #{tpu_custom_call.1} parent=1 // pred_check
      _
    $region31: #{tpu_custom_call.1} parent=1 // pred_check_branch
      %2664 = sbr.rel (0) target = $region33
    $region32: #{tpu_custom_call.1} parent=1 // pred_region
      %2665 = dma.done [#allocation4], 4480
    $region33: #{tpu_custom_call.1} parent=1 // pred_fallthru
      _
    %2666 = vsyncpa [#allocation3], 1
    %2667 = vsyncpa [#allocation4], 1

</llo_original>
